<compile_context>
chip_gen: v7x
topology: tpu7x:2x2x1
jax: 0.10.0
libtpu: 0.0.40
codegen_flags: <defaults>
</compile_context>

<pallas_src>
import functools

import jax
import jax.numpy as jnp
from jax.experimental import pallas as pl
from jax.experimental.pallas import tpu as pltpu


def _fused_actor_critic_kernel(
    xa_ref, w1_ref, b1_ref, w2_ref, b2_ref, w3_ref, b3_ref, out_ref,
    *, state_dim, action_dim,
):
    """One batch tile of the fused actor+critic forward.

    Input slab xa_ref: (TB, S+1)  -- state in cols 0..S-1, action (as f32) in col S.
    Output slab (lane-dense, width 128):
      [:, 0:A]   action_probs
      [:, A]     log_prob(action)
      [:, A+1]   entropy
      [:, A+2]   state_value
      [:, A+3:]  zero padding
    """
    xa = xa_ref[...]                                               # (TB, S+1) f32
    action = xa[:, state_dim:state_dim + 1].astype(jnp.int32)      # (TB, 1)

    # 3 fused MXU matmuls (actor + critic together); w1 has a zero row for the
    # action column, w3/b3 are padded to the full 128-lane output width.
    h = jnp.tanh(jnp.dot(xa, w1_ref[...], preferred_element_type=jnp.float32)
                 + b1_ref[...])                                    # (TB, 2H)
    h = jnp.tanh(jnp.dot(h, w2_ref[...], preferred_element_type=jnp.float32)
                 + b2_ref[...])                                    # (TB, 2H)
    y = jnp.dot(h, w3_ref[...], preferred_element_type=jnp.float32) + b3_ref[...]
    # y: (TB, 128); logits in cols 0..A-1, value in col A+2, zeros elsewhere.

    col = jax.lax.broadcasted_iota(jnp.int32, y.shape, 1)          # (TB, 128)
    is_logit = col < action_dim

    # Numerically-stable softmax / log-softmax over the logit columns only,
    # computed full-width (one vreg wide anyway -> no extra cost).
    masked = jnp.where(is_logit, y, jnp.float32(-1e30))
    m = jnp.max(masked, axis=-1, keepdims=True)
    shifted = masked - m
    e = jnp.where(is_logit, jnp.exp(shifted), 0.0)
    denom = jnp.sum(e, axis=-1, keepdims=True)
    probs = e * pl.reciprocal(denom, approx=False)                 # exact; reuses e
    log_probs = jnp.where(is_logit, shifted - jnp.log(denom), 0.0)

    # Categorical.log_prob(action): iota-compare gather (no one-hot input).
    sel = col == action
    logp = jnp.sum(jnp.where(sel, log_probs, 0.0), axis=-1, keepdims=True)

    # Categorical.entropy(): -sum(p * log p); masked cols contribute 0*0.
    ent = -jnp.sum(probs * log_probs, axis=-1, keepdims=True)

    # Splice everything into the layer-3 slab in registers -> ONE unmasked store.
    slab = jnp.where(is_logit, probs, y)              # probs; value stays at col A+2
    slab = jnp.where(col == action_dim, logp, slab)   # col A
    slab = jnp.where(col == action_dim + 1, ent, slab)  # col A+1
    out_ref[...] = slab


def fuse_params(p, state_dim, out_w=128):
    """Fuse separate actor/critic weights into the 3-matmul, lane-dense form.

    Layer 1: (S+1, 2H)  -- extra zero input row for the carried action column.
    Layer 2: (2H, 2H)   -- block-diagonal [w2a 0; 0 w2v].
    Layer 3: (2H, 128)  -- logits in cols 0..A-1, value in col A+2, zeros else.
    """
    H = p["w1a"].shape[1]
    A = p["w3a"].shape[1]
    out_w = max(out_w, ((A + 3 + 127) // 128) * 128)

    w1 = jnp.concatenate([p["w1a"], p["w1v"]], axis=1)             # (S, 2H)
    w1 = jnp.concatenate([w1, jnp.zeros((1, 2 * H), jnp.float32)], axis=0)  # (S+1, 2H)
    b1 = jnp.concatenate([p["b1a"], p["b1v"]], axis=1)             # (1, 2H)

    zHH = jnp.zeros((H, H), jnp.float32)
    w2 = jnp.concatenate(
        [jnp.concatenate([p["w2a"], zHH], axis=1),
         jnp.concatenate([zHH, p["w2v"]], axis=1)], axis=0)        # (2H, 2H)
    b2 = jnp.concatenate([p["b2a"], p["b2v"]], axis=1)             # (1, 2H)

    w3 = jnp.zeros((2 * H, out_w), jnp.float32)
    w3 = w3.at[:H, :A].set(p["w3a"])                               # actor logits
    w3 = w3.at[H:, A + 2].set(p["w3v"][:, 0])                      # critic value
    b3 = jnp.zeros((1, out_w), jnp.float32)
    b3 = b3.at[:, :A].set(p["b3a"])
    b3 = b3.at[:, A + 2].set(p["b3v"][:, 0])
    return {"w1": w1, "b1": b1, "w2": w2, "b2": b2, "w3": w3, "b3": b3}


@functools.partial(jax.jit, static_argnames=("action_dim", "batch_tile"))
def actor_critic_evaluate(state, action, fused, *, action_dim, batch_tile=512):
    """Pallas-backed equivalent of ActorCritic.evaluate(state, action).

    Returns (action_logprobs[B], state_value[B], dist_entropy[B], action_probs[B,A]).

    batch_tile guidance: default 512 is good for large PPO update batches on all
    generations (per-tile VMEM < 2 MiB).  On v7x keep num_tiles >= 2 (i.e.
    batch_tile <= B/2) so the "parallel" batch axis can shard across both
    TensorCores; for very large batches 1024-2048 also works.
    """
    B, S = state.shape
    A = action_dim
    H2 = fused["w2"].shape[0]
    out_w = fused["w3"].shape[1]

    num_tiles = pl.cdiv(B, batch_tile)
    Bp = num_tiles * batch_tile

    # One merged per-tile input DMA: [state | action(f32)].  Actions are small
    # non-negative ints, exactly representable in f32.
    xa = jnp.concatenate([state, action.astype(jnp.float32)[:, None]], axis=1)
    if Bp != B:
        xa = jnp.pad(xa, ((0, Bp - B), (0, 0)))

    kernel = functools.partial(
        _fused_actor_critic_kernel, state_dim=S, action_dim=A)
    const = lambda i: (0, 0)   # weights: single block, VMEM-resident across the grid

    n_weight_elems = sum(int(v.size) for v in fused.values())
    cost = pl.CostEstimate(
        flops=int(2 * Bp * ((S + 1) * H2 + H2 * H2 + H2 * out_w)),
        transcendentals=int(Bp * (2 * H2 + out_w + 2)),   # 2 tanh layers + exp + log/recip
        bytes_accessed=int(4 * (Bp * (S + 1 + out_w) + n_weight_elems)),
    )

    packed = pl.pallas_call(
        kernel,
        out_shape=jax.ShapeDtypeStruct((Bp, out_w), jnp.float32),
        grid=(num_tiles,),
        in_specs=[
            pl.BlockSpec((batch_tile, S + 1), lambda i: (i, 0)),   # merged state+action tile
            pl.BlockSpec(fused["w1"].shape, const),
            pl.BlockSpec(fused["b1"].shape, const),
            pl.BlockSpec(fused["w2"].shape, const),
            pl.BlockSpec(fused["b2"].shape, const),
            pl.BlockSpec(fused["w3"].shape, const),
            pl.BlockSpec(fused["b3"].shape, const),
        ],
        out_specs=pl.BlockSpec((batch_tile, out_w), lambda i: (i, 0)),
        compiler_params=pltpu.CompilerParams(
            dimension_semantics=("parallel",)),   # shards batch across TCs on v7x
        cost_estimate=cost,
    )(xa, fused["w1"], fused["b1"], fused["w2"], fused["b2"],
      fused["w3"], fused["b3"])

    packed = packed[:B]
    probs = packed[:, :A]
    logp = packed[:, A]
    ent = packed[:, A + 1]
    val = packed[:, A + 2]
    return logp, val, ent, probs


def init_params(key, state_dim, action_dim, n_latent_var):
    """PyTorch-style uniform(+/- 1/sqrt(fan_in)) init.

    Weights stored as (in_features, out_features) == W.T so the kernel does x @ W.
    Biases stored as (1, out_features) for 2-D TPU-friendly broadcasting.
    """
    def linear(k, fan_in, fan_out):
        kw, kb = jax.random.split(k)
        bound = 1.0 / jnp.sqrt(fan_in)
        w = jax.random.uniform(kw, (fan_in, fan_out), jnp.float32, -bound, bound)
        b = jax.random.uniform(kb, (1, fan_out), jnp.float32, -bound, bound)
        return w, b

    keys = jax.random.split(key, 6)
    p = {}
    p["w1a"], p["b1a"] = linear(keys[0], state_dim, n_latent_var)
    p["w2a"], p["b2a"] = linear(keys[1], n_latent_var, n_latent_var)
    p["w3a"], p["b3a"] = linear(keys[2], n_latent_var, action_dim)
    p["w1v"], p["b1v"] = linear(keys[3], state_dim, n_latent_var)
    p["w2v"], p["b2v"] = linear(keys[4], n_latent_var, n_latent_var)
    p["w3v"], p["b3v"] = linear(keys[5], n_latent_var, 1)
    return p


def reference_evaluate(state, action, params):
    """Plain-JAX reference of the PyTorch forward semantics for validation."""
    h = jnp.tanh(state @ params["w1a"] + params["b1a"])
    h = jnp.tanh(h @ params["w2a"] + params["b2a"])
    logits = h @ params["w3a"] + params["b3a"]
    probs = jax.nn.softmax(logits, axis=-1)
    logp_full = jax.nn.log_softmax(logits, axis=-1)
    logp = jnp.take_along_axis(logp_full, action[:, None], axis=-1)[:, 0]
    ent = -jnp.sum(probs * logp_full, axis=-1)

    v = jnp.tanh(state @ params["w1v"] + params["b1v"])
    v = jnp.tanh(v @ params["w2v"] + params["b2v"])
    val = (v @ params["w3v"] + params["b3v"])[:, 0]
    return logp, val, ent, probs


if __name__ == "__main__":
    # CartPole-like configuration.  batch_tile=128 here keeps num_tiles == 2 so
    # the parallel batch axis exercises the grid (and both v7x TensorCores);
    # for real PPO update batches use the default batch_tile=512 (or larger).
    STATE_DIM, ACTION_DIM, N_LATENT = 4, 2, 32
    BATCH, BATCH_TILE = 256, 128

    key = jax.random.PRNGKey(0)
    k_params, k_state, k_action = jax.random.split(key, 3)

    params = init_params(k_params, STATE_DIM, ACTION_DIM, N_LATENT)
    fused = fuse_params(params, STATE_DIM)

    state = jax.random.normal(k_state, (BATCH, STATE_DIM), jnp.float32)
    action = jax.random.randint(k_action, (BATCH,), 0, ACTION_DIM, jnp.int32)

    logp, value, entropy, probs = actor_critic_evaluate(
        state, action, fused, action_dim=ACTION_DIM, batch_tile=BATCH_TILE)
    jax.block_until_ready((logp, value, entropy, probs))

    # Validate against a plain-JAX reference built from the *unfused* params.
    r_logp, r_val, r_ent, r_probs = reference_evaluate(state, action, params)
    assert jnp.allclose(logp, r_logp, atol=1e-5, rtol=1e-4)
    assert jnp.allclose(value, r_val, atol=1e-5, rtol=1e-4)
    assert jnp.allclose(entropy, r_ent, atol=1e-5, rtol=1e-4)
    assert jnp.allclose(probs, r_probs, atol=1e-5, rtol=1e-4)

    print("KERNEL_OK")
</pallas_src>

<mosaic_0001>
module attributes {stable_mosaic.version = 11 : i64} {
  func.func @_fused_actor_critic_kernel(%arg0: i32, %arg1: memref<128x5xf32, #tpu.memory_space<vmem>>, %arg2: memref<5x64xf32, #tpu.memory_space<vmem>>, %arg3: memref<1x64xf32, #tpu.memory_space<vmem>>, %arg4: memref<64x64xf32, #tpu.memory_space<vmem>>, %arg5: memref<1x64xf32, #tpu.memory_space<vmem>>, %arg6: memref<64x128xf32, #tpu.memory_space<vmem>>, %arg7: memref<1x128xf32, #tpu.memory_space<vmem>>, %arg8: memref<128x128xf32, #tpu.memory_space<vmem>>) attributes {dimension_semantics = [#tpu.dimension_semantics<parallel>], iteration_bounds = array<i64: 2>, scalar_prefetch = 0 : i64, scratch_operands = 0 : i64, tpu.core_type = #tpu.core_type<tc>, window_params = [{transform_indices = @transform_0, window_bounds = array<i64: 128, 5>}, {pipeline_mode = #tpu.pipeline_mode<synchronous>, transform_indices = @transform_1, window_bounds = array<i64: 5, 64>}, {pipeline_mode = #tpu.pipeline_mode<synchronous>, transform_indices = @transform_2, window_bounds = array<i64: 1, 64>}, {pipeline_mode = #tpu.pipeline_mode<synchronous>, transform_indices = @transform_3, window_bounds = array<i64: 64, 64>}, {pipeline_mode = #tpu.pipeline_mode<synchronous>, transform_indices = @transform_4, window_bounds = array<i64: 1, 64>}, {pipeline_mode = #tpu.pipeline_mode<synchronous>, transform_indices = @transform_5, window_bounds = array<i64: 64, 128>}, {pipeline_mode = #tpu.pipeline_mode<synchronous>, transform_indices = @transform_6, window_bounds = array<i64: 1, 128>}, {transform_indices = @transform_7, window_bounds = array<i64: 128, 128>}]} {
    %c0 = arith.constant 0 : index
    %c0_0 = arith.constant 0 : index
    %0 = vector.load %arg1[%c0, %c0_0] : memref<128x5xf32, #tpu.memory_space<vmem>>, vector<128x5xf32>
    %1 = vector.extract_strided_slice %0 {offsets = [0, 4], sizes = [128, 1], strides = [1, 1]} : vector<128x5xf32> to vector<128x1xf32>
    %2 = arith.fptosi %1 : vector<128x1xf32> to vector<128x1xi32>
    %c0_1 = arith.constant 0 : index
    %c0_2 = arith.constant 0 : index
    %3 = vector.load %arg2[%c0_1, %c0_2] : memref<5x64xf32, #tpu.memory_space<vmem>>, vector<5x64xf32>
    %cst = arith.constant dense<0.000000e+00> : vector<128x64xf32>
    %4 = tpu.matmul %0, %3, %cst {dimension_numbers = #tpu.dot_dimension_numbers<[1], [0], [0], [1], [0, 0, 1, 1], [], []>} : vector<128x5xf32>, vector<5x64xf32>, vector<128x64xf32> -> vector<128x64xf32>
    %c0_3 = arith.constant 0 : index
    %c0_4 = arith.constant 0 : index
    %5 = vector.load %arg3[%c0_3, %c0_4] : memref<1x64xf32, #tpu.memory_space<vmem>>, vector<1x64xf32>
    %6 = vector.broadcast %5 : vector<1x64xf32> to vector<128x64xf32>
    %7 = arith.addf %4, %6 : vector<128x64xf32>
    %8 = math.tanh %7 : vector<128x64xf32>
    %c0_5 = arith.constant 0 : index
    %c0_6 = arith.constant 0 : index
    %9 = vector.load %arg4[%c0_5, %c0_6] : memref<64x64xf32, #tpu.memory_space<vmem>>, vector<64x64xf32>
    %cst_7 = arith.constant dense<0.000000e+00> : vector<128x64xf32>
    %10 = tpu.matmul %8, %9, %cst_7 {dimension_numbers = #tpu.dot_dimension_numbers<[1], [0], [0], [1], [0, 0, 1, 1], [], []>} : vector<128x64xf32>, vector<64x64xf32>, vector<128x64xf32> -> vector<128x64xf32>
    %c0_8 = arith.constant 0 : index
    %c0_9 = arith.constant 0 : index
    %11 = vector.load %arg5[%c0_8, %c0_9] : memref<1x64xf32, #tpu.memory_space<vmem>>, vector<1x64xf32>
    %12 = vector.broadcast %11 : vector<1x64xf32> to vector<128x64xf32>
    %13 = arith.addf %10, %12 : vector<128x64xf32>
    %14 = math.tanh %13 : vector<128x64xf32>
    %c0_10 = arith.constant 0 : index
    %c0_11 = arith.constant 0 : index
    %15 = vector.load %arg6[%c0_10, %c0_11] : memref<64x128xf32, #tpu.memory_space<vmem>>, vector<64x128xf32>
    %cst_12 = arith.constant dense<0.000000e+00> : vector<128x128xf32>
    %16 = tpu.matmul %14, %15, %cst_12 {dimension_numbers = #tpu.dot_dimension_numbers<[1], [0], [0], [1], [0, 0, 1, 1], [], []>} : vector<128x64xf32>, vector<64x128xf32>, vector<128x128xf32> -> vector<128x128xf32>
    %c0_13 = arith.constant 0 : index
    %c0_14 = arith.constant 0 : index
    %17 = vector.load %arg7[%c0_13, %c0_14] : memref<1x128xf32, #tpu.memory_space<vmem>>, vector<1x128xf32>
    %18 = vector.broadcast %17 : vector<1x128xf32> to vector<128x128xf32>
    %19 = arith.addf %16, %18 : vector<128x128xf32>
    %20 = tpu.iota {dimensions = array<i32: 1>} : vector<128x128xi32>
    %c2_i32 = arith.constant 2 : i32
    %21 = vector.broadcast %c2_i32 : i32 to vector<128x128xi32>
    %22 = arith.cmpi slt, %20, %21 : vector<128x128xi32>
    %cst_15 = arith.constant -1.000000e+30 : f32
    %23 = vector.broadcast %cst_15 : f32 to vector<128x128xf32>
    %24 = arith.select %22, %19, %23 : vector<128x128xi1>, vector<128x128xf32>
    %cst_16 = arith.constant dense<0xFF800000> : vector<128xf32>
    %25 = vector.multi_reduction <maximumf>, %24, %cst_16 [1] : vector<128x128xf32> to vector<128xf32>
    %26 = vector.shape_cast %25 : vector<128xf32> to vector<128x1xf32>
    %27 = vector.broadcast %26 : vector<128x1xf32> to vector<128x128xf32>
    %28 = arith.subf %24, %27 : vector<128x128xf32>
    %29 = math.exp %28 : vector<128x128xf32>
    %cst_17 = arith.constant 0.000000e+00 : f32
    %30 = vector.broadcast %cst_17 : f32 to vector<128x128xf32>
    %31 = arith.select %22, %29, %30 : vector<128x128xi1>, vector<128x128xf32>
    %cst_18 = arith.constant dense<0.000000e+00> : vector<128xf32>
    %32 = vector.multi_reduction <add>, %31, %cst_18 [1] : vector<128x128xf32> to vector<128xf32>
    %33 = vector.shape_cast %32 : vector<128xf32> to vector<128x1xf32>
    %34 = tpu.reciprocal %33 : vector<128x1xf32> -> vector<128x1xf32>
    %35 = vector.broadcast %34 : vector<128x1xf32> to vector<128x128xf32>
    %36 = arith.mulf %31, %35 : vector<128x128xf32>
    %37 = math.log %33 : vector<128x1xf32>
    %38 = vector.broadcast %37 : vector<128x1xf32> to vector<128x128xf32>
    %39 = arith.subf %28, %38 : vector<128x128xf32>
    %cst_19 = arith.constant 0.000000e+00 : f32
    %40 = vector.broadcast %cst_19 : f32 to vector<128x128xf32>
    %41 = arith.select %22, %39, %40 : vector<128x128xi1>, vector<128x128xf32>
    %42 = vector.broadcast %2 : vector<128x1xi32> to vector<128x128xi32>
    %43 = arith.cmpi eq, %20, %42 : vector<128x128xi32>
    %cst_20 = arith.constant 0.000000e+00 : f32
    %44 = vector.broadcast %cst_20 : f32 to vector<128x128xf32>
    %45 = arith.select %43, %41, %44 : vector<128x128xi1>, vector<128x128xf32>
    %cst_21 = arith.constant dense<0.000000e+00> : vector<128xf32>
    %46 = vector.multi_reduction <add>, %45, %cst_21 [1] : vector<128x128xf32> to vector<128xf32>
    %47 = vector.shape_cast %46 : vector<128xf32> to vector<128x1xf32>
    %48 = arith.mulf %36, %41 : vector<128x128xf32>
    %cst_22 = arith.constant dense<0.000000e+00> : vector<128xf32>
    %49 = vector.multi_reduction <add>, %48, %cst_22 [1] : vector<128x128xf32> to vector<128xf32>
    %50 = vector.shape_cast %49 : vector<128xf32> to vector<128x1xf32>
    %cst_23 = arith.constant 0.000000e+00 : f32
    %51 = vector.broadcast %cst_23 : f32 to vector<128x1xf32>
    %52 = arith.subf %51, %50 : vector<128x1xf32>
    %53 = arith.select %22, %36, %19 : vector<128x128xi1>, vector<128x128xf32>
    %c2_i32_24 = arith.constant 2 : i32
    %54 = vector.broadcast %c2_i32_24 : i32 to vector<128x128xi32>
    %55 = arith.cmpi eq, %20, %54 : vector<128x128xi32>
    %56 = vector.shape_cast %47 : vector<128x1xf32> to vector<128x1xf32>
    %57 = vector.broadcast %56 : vector<128x1xf32> to vector<128x128xf32>
    %58 = arith.select %55, %57, %53 : vector<128x128xi1>, vector<128x128xf32>
    %c3_i32 = arith.constant 3 : i32
    %59 = vector.broadcast %c3_i32 : i32 to vector<128x128xi32>
    %60 = arith.cmpi eq, %20, %59 : vector<128x128xi32>
    %61 = vector.shape_cast %52 : vector<128x1xf32> to vector<128x1xf32>
    %62 = vector.broadcast %61 : vector<128x1xf32> to vector<128x128xf32>
    %63 = arith.select %60, %62, %58 : vector<128x128xi1>, vector<128x128xf32>
    %c0_25 = arith.constant 0 : index
    %c0_26 = arith.constant 0 : index
    %64 = vector.load %arg8[%c0_25, %c0_26] : memref<128x128xf32, #tpu.memory_space<vmem>>, vector<128x128xf32>
    tpu.vector_store %arg8[%c0_25, %c0_26], %63 {strides = array<i32>} : memref<128x128xf32, #tpu.memory_space<vmem>>, vector<128x128xf32>,
    return
  }
  func.func @transform_0(%arg0: i32) -> (i32, i32) {
    %c0_i32 = arith.constant 0 : i32
    %c0_i32_0 = arith.constant 0 : i32
    return %arg0, %c0_i32 : i32, i32
  }
  func.func @transform_1(%arg0: i32) -> (i32, i32) {
    %c0_i32 = arith.constant 0 : i32
    %c0_i32_0 = arith.constant 0 : i32
    %c0_i32_1 = arith.constant 0 : i32
    return %c0_i32, %c0_i32_0 : i32, i32
  }
  func.func @transform_2(%arg0: i32) -> (i32, i32) {
    %c0_i32 = arith.constant 0 : i32
    %c0_i32_0 = arith.constant 0 : i32
    %c0_i32_1 = arith.constant 0 : i32
    return %c0_i32, %c0_i32_0 : i32, i32
  }
  func.func @transform_3(%arg0: i32) -> (i32, i32) {
    %c0_i32 = arith.constant 0 : i32
    %c0_i32_0 = arith.constant 0 : i32
    %c0_i32_1 = arith.constant 0 : i32
    return %c0_i32, %c0_i32_0 : i32, i32
  }
  func.func @transform_4(%arg0: i32) -> (i32, i32) {
    %c0_i32 = arith.constant 0 : i32
    %c0_i32_0 = arith.constant 0 : i32
    %c0_i32_1 = arith.constant 0 : i32
    return %c0_i32, %c0_i32_0 : i32, i32
  }
  func.func @transform_5(%arg0: i32) -> (i32, i32) {
    %c0_i32 = arith.constant 0 : i32
    %c0_i32_0 = arith.constant 0 : i32
    %c0_i32_1 = arith.constant 0 : i32
    return %c0_i32, %c0_i32_0 : i32, i32
  }
  func.func @transform_6(%arg0: i32) -> (i32, i32) {
    %c0_i32 = arith.constant 0 : i32
    %c0_i32_0 = arith.constant 0 : i32
    %c0_i32_1 = arith.constant 0 : i32
    return %c0_i32, %c0_i32_0 : i32, i32
  }
  func.func @transform_7(%arg0: i32) -> (i32, i32) {
    %c0_i32 = arith.constant 0 : i32
    %c0_i32_0 = arith.constant 0 : i32
    return %arg0, %c0_i32 : i32, i32
  }
}

</mosaic_0001>

<llo_original>
// kernel: actor_critic_evaluate.1
$region0: #{actor_critic_evaluate.1}
  #allocation0 [shape = 'u32[]', space=smem, size = 0x4, offset = 0x4, fixed_abs, tag = 'smem constant byte address 0x4 - core index']
  #allocation1 [shape = 'u32[144,128]{1,0:T(1,128)}', space=vmem, size = 0x12000, scoped, tag = 'internal scratch']
  %s0 = inlined_call_operand.vmem [shape: f32[256,5], index: 0, kind: input, shape index: {}]
  %s1 = inlined_call_operand.vmem [shape: f32[5,64], index: 1, kind: input, shape index: {}]
  %s2 = inlined_call_operand.vmem [shape: f32[1,64], index: 2, kind: input, shape index: {}]
  %s3 = inlined_call_operand.vmem [shape: f32[64,64], index: 3, kind: input, shape index: {}]
  %s4 = inlined_call_operand.vmem [shape: f32[1,64], index: 4, kind: input, shape index: {}]
  %s5 = inlined_call_operand.vmem [shape: f32[64,128], index: 5, kind: input, shape index: {}]
  %s6 = inlined_call_operand.vmem [shape: f32[1,128], index: 6, kind: input, shape index: {}]
  %s7 = inlined_call_operand.vmem [shape: f32[256,128], index: 7, kind: output, shape index: {}]
  %s8 = sld [smem:[#allocation0]]
  $region61: #{actor_critic_evaluate.1} parent=0
    _
  %s10 = ssub.s32 1, %s8
  %s11 = scalar_select 0, %s10, %s8
  loop: start=0, step=1, limit=4
  $region2: #{actor_critic_evaluate.1} parent=0 // loop_pre_header
    _
  $region3: #{actor_critic_evaluate.1} parent=0 // loop_header
    %s13 = sphi 0, %s17
    %p14 = scmp.ge.s32.totalorder %s13, 4
    %s23 = sphi 0, %s25
    %s26 = sphi 0, %s23
    %s27 = sphi 0, %s26
    %s43 = sphi 0, %s27
    %s47 = sphi 0, %s47
    %s49 = sphi 0, %s47
    %s50 = sphi 0, %s49
    %s64 = sphi 0, %s50
    %s68 = sphi 0, %s68
    %s70 = sphi 0, %s68
    %s71 = sphi 0, %s70
    %s85 = sphi 0, %s71
    %s89 = sphi 0, %s89
    %s91 = sphi 0, %s89
    %s92 = sphi 0, %s91
    %s106 = sphi 0, %s92
    %s110 = sphi 0, %s110
    %s112 = sphi 0, %s110
    %s113 = sphi 0, %s112
    %s127 = sphi 0, %s113
    %s131 = sphi 0, %s131
    %s133 = sphi 0, %s131
    %s134 = sphi 0, %s133
    %s148 = sphi 0, %s134
    %s152 = sphi 0, %s152
    %s154 = sphi 0, %s152
    %s155 = sphi 0, %s154
    %s169 = sphi 0, %s155
    %s175 = sphi 0, %s177
    %s178 = sphi 0, %s175
    %s179 = sphi 0, %s178
    %s195 = sphi 0, %s179
  $region4: #{actor_critic_evaluate.1} parent=0 // loop_header_branch
    %16 = sbr.rel (%p14) target = $region8
  $region5: #{actor_critic_evaluate.1} parent=0 // loop_body
    %s18 = ssub.s32 %s13, 1
    %s19 = ssub.s32 %s13, 2
    %s20 = sadd.s32 %s13, 1
    %s21 = ssub.s32 %s13, %s20
    %p22 = scmp.eq.s32.totalorder %s21, 0
    %s24 = sadd.s32 %s23, 1
    %s25 = scalar_select %p22, %s23, %s24
    %p28 = pneg %p22
    %p29 = scmp.eq.s32.totalorder %s13, 1
    %p30 = por %p28, %p29
    %p31 = scmp.ne.s32.totalorder %s23, %s26
    %p32 = scmp.eq.s32.totalorder %s13, 0
    %p33 = por %p31, %p32
    %p34 = scmp.ne.s32.totalorder %s23, %s26
    %p35 = scmp.eq.s32.totalorder %s18, 1
    %p36 = por %p34, %p35
    %p37 = scmp.ne.s32.totalorder %s26, %s27
    %p38 = scmp.eq.s32.totalorder %s18, 0
    %p39 = por %p37, %p38
    %p40 = scmp.ne.s32.totalorder %s26, %s27
    %p41 = scmp.eq.s32.totalorder %s19, 1
    %p42 = por %p40, %p41
    %p44 = scmp.ne.s32.totalorder %s27, %s43
    %p45 = scmp.eq.s32.totalorder %s19, 0
    %p46 = por %p44, %p45
    %s48 = sadd.s32 %s47, 1
    %p51 = scmp.eq.s32.totalorder %s13, 1
    %p52 = scmp.ne.s32.totalorder %s47, %s49
    %p53 = scmp.eq.s32.totalorder %s13, 0
    %p54 = por %p52, %p53
    %p55 = scmp.ne.s32.totalorder %s47, %s49
    %p56 = scmp.eq.s32.totalorder %s18, 1
    %p57 = por %p55, %p56
    %p58 = scmp.ne.s32.totalorder %s49, %s50
    %p59 = scmp.eq.s32.totalorder %s18, 0
    %p60 = por %p58, %p59
    %p61 = scmp.ne.s32.totalorder %s49, %s50
    %p62 = scmp.eq.s32.totalorder %s19, 1
    %p63 = por %p61, %p62
    %p65 = scmp.ne.s32.totalorder %s50, %s64
    %p66 = scmp.eq.s32.totalorder %s19, 0
    %p67 = por %p65, %p66
    %s69 = sadd.s32 %s68, 1
    %p72 = scmp.eq.s32.totalorder %s13, 1
    %p73 = scmp.ne.s32.totalorder %s68, %s70
    %p74 = scmp.eq.s32.totalorder %s13, 0
    %p75 = por %p73, %p74
    %p76 = scmp.ne.s32.totalorder %s68, %s70
    %p77 = scmp.eq.s32.totalorder %s18, 1
    %p78 = por %p76, %p77
    %p79 = scmp.ne.s32.totalorder %s70, %s71
    %p80 = scmp.eq.s32.totalorder %s18, 0
    %p81 = por %p79, %p80
    %p82 = scmp.ne.s32.totalorder %s70, %s71
    %p83 = scmp.eq.s32.totalorder %s19, 1
    %p84 = por %p82, %p83
    %p86 = scmp.ne.s32.totalorder %s71, %s85
    %p87 = scmp.eq.s32.totalorder %s19, 0
    %p88 = por %p86, %p87
    %s90 = sadd.s32 %s89, 1
    %p93 = scmp.eq.s32.totalorder %s13, 1
    %p94 = scmp.ne.s32.totalorder %s89, %s91
    %p95 = scmp.eq.s32.totalorder %s13, 0
    %p96 = por %p94, %p95
    %p97 = scmp.ne.s32.totalorder %s89, %s91
    %p98 = scmp.eq.s32.totalorder %s18, 1
    %p99 = por %p97, %p98
    %p100 = scmp.ne.s32.totalorder %s91, %s92
    %p101 = scmp.eq.s32.totalorder %s18, 0
    %p102 = por %p100, %p101
    %p103 = scmp.ne.s32.totalorder %s91, %s92
    %p104 = scmp.eq.s32.totalorder %s19, 1
    %p105 = por %p103, %p104
    %p107 = scmp.ne.s32.totalorder %s92, %s106
    %p108 = scmp.eq.s32.totalorder %s19, 0
    %p109 = por %p107, %p108
    %s111 = sadd.s32 %s110, 1
    %p114 = scmp.eq.s32.totalorder %s13, 1
    %p115 = scmp.ne.s32.totalorder %s110, %s112
    %p116 = scmp.eq.s32.totalorder %s13, 0
    %p117 = por %p115, %p116
    %p118 = scmp.ne.s32.totalorder %s110, %s112
    %p119 = scmp.eq.s32.totalorder %s18, 1
    %p120 = por %p118, %p119
    %p121 = scmp.ne.s32.totalorder %s112, %s113
    %p122 = scmp.eq.s32.totalorder %s18, 0
    %p123 = por %p121, %p122
    %p124 = scmp.ne.s32.totalorder %s112, %s113
    %p125 = scmp.eq.s32.totalorder %s19, 1
    %p126 = por %p124, %p125
    %p128 = scmp.ne.s32.totalorder %s113, %s127
    %p129 = scmp.eq.s32.totalorder %s19, 0
    %p130 = por %p128, %p129
    %s132 = sadd.s32 %s131, 1
    %p135 = scmp.eq.s32.totalorder %s13, 1
    %p136 = scmp.ne.s32.totalorder %s131, %s133
    %p137 = scmp.eq.s32.totalorder %s13, 0
    %p138 = por %p136, %p137
    %p139 = scmp.ne.s32.totalorder %s131, %s133
    %p140 = scmp.eq.s32.totalorder %s18, 1
    %p141 = por %p139, %p140
    %p142 = scmp.ne.s32.totalorder %s133, %s134
    %p143 = scmp.eq.s32.totalorder %s18, 0
    %p144 = por %p142, %p143
    %p145 = scmp.ne.s32.totalorder %s133, %s134
    %p146 = scmp.eq.s32.totalorder %s19, 1
    %p147 = por %p145, %p146
    %p149 = scmp.ne.s32.totalorder %s134, %s148
    %p150 = scmp.eq.s32.totalorder %s19, 0
    %p151 = por %p149, %p150
    %s153 = sadd.s32 %s152, 1
    %p156 = scmp.eq.s32.totalorder %s13, 1
    %p157 = scmp.ne.s32.totalorder %s152, %s154
    %p158 = scmp.eq.s32.totalorder %s13, 0
    %p159 = por %p157, %p158
    %p160 = scmp.ne.s32.totalorder %s152, %s154
    %p161 = scmp.eq.s32.totalorder %s18, 1
    %p162 = por %p160, %p161
    %p163 = scmp.ne.s32.totalorder %s154, %s155
    %p164 = scmp.eq.s32.totalorder %s18, 0
    %p165 = por %p163, %p164
    %p166 = scmp.ne.s32.totalorder %s154, %s155
    %p167 = scmp.eq.s32.totalorder %s19, 1
    %p168 = por %p166, %p167
    %p170 = scmp.ne.s32.totalorder %s155, %s169
    %p171 = scmp.eq.s32.totalorder %s19, 0
    %p172 = por %p170, %p171
    %s173 = ssub.s32 %s13, %s20
    %p174 = scmp.eq.s32.totalorder %s173, 0
    %s176 = sadd.s32 %s175, 1
    %s177 = scalar_select %p174, %s175, %s176
    %p180 = pneg %p174
    %p181 = scmp.eq.s32.totalorder %s13, 1
    %p182 = por %p180, %p181
    %p183 = scmp.ne.s32.totalorder %s175, %s178
    %p184 = scmp.eq.s32.totalorder %s13, 0
    %p185 = por %p183, %p184
    %p186 = scmp.ne.s32.totalorder %s175, %s178
    %p187 = scmp.eq.s32.totalorder %s18, 1
    %p188 = por %p186, %p187
    %p189 = scmp.ne.s32.totalorder %s178, %s179
    %p190 = scmp.eq.s32.totalorder %s18, 0
    %p191 = por %p189, %p190
    %p192 = scmp.ne.s32.totalorder %s178, %s179
    %p193 = scmp.eq.s32.totalorder %s19, 1
    %p194 = por %p192, %p193
    %p196 = scmp.ne.s32.totalorder %s179, %s195
    %p197 = scmp.eq.s32.totalorder %s19, 0
    %p198 = por %p196, %p197
    %p199 = scmp.le.s32.totalorder 1, %s13
    %p200 = scmp.lt.s32.totalorder %s13, 3
    %p201 = pnand %p199, %p200
    %p202 = pneg %p201
    // Predicated region
    $region9: #{actor_critic_evaluate.1} parent=5 // pred_check
      _
    $region10: #{actor_critic_evaluate.1} parent=5 // pred_check_branch
      %204 = sbr.rel (%p201) target = $region12
    $region11: #{actor_critic_evaluate.1} parent=5 // pred_region
      %s205 = ssub.s32 %s13, 1
      // Predicated region
      $region13: #{actor_critic_evaluate.1} parent=11 // pred_check
        %p206 = pneg %p60
      $region14: #{actor_critic_evaluate.1} parent=11 // pred_check_branch
        %208 = sbr.rel (%p206) target = $region16
      $region15: #{actor_critic_evaluate.1} parent=11 // pred_region
        _
      $region16: #{actor_critic_evaluate.1} parent=11 // pred_fallthru
        _
      // Predicated region
      $region17: #{actor_critic_evaluate.1} parent=11 // pred_check
        %p209 = pneg %p81
      $region18: #{actor_critic_evaluate.1} parent=11 // pred_check_branch
        %211 = sbr.rel (%p209) target = $region20
      $region19: #{actor_critic_evaluate.1} parent=11 // pred_region
        _
      $region20: #{actor_critic_evaluate.1} parent=11 // pred_fallthru
        _
      // Predicated region
      $region21: #{actor_critic_evaluate.1} parent=11 // pred_check
        %p212 = pneg %p102
      $region22: #{actor_critic_evaluate.1} parent=11 // pred_check_branch
        %214 = sbr.rel (%p212) target = $region24
      $region23: #{actor_critic_evaluate.1} parent=11 // pred_region
        _
      $region24: #{actor_critic_evaluate.1} parent=11 // pred_fallthru
        _
      // Predicated region
      $region25: #{actor_critic_evaluate.1} parent=11 // pred_check
        %p215 = pneg %p123
      $region26: #{actor_critic_evaluate.1} parent=11 // pred_check_branch
        %217 = sbr.rel (%p215) target = $region28
      $region27: #{actor_critic_evaluate.1} parent=11 // pred_region
        _
      $region28: #{actor_critic_evaluate.1} parent=11 // pred_fallthru
        _
      // Predicated region
      $region29: #{actor_critic_evaluate.1} parent=11 // pred_check
        %p218 = pneg %p144
      $region30: #{actor_critic_evaluate.1} parent=11 // pred_check_branch
        %220 = sbr.rel (%p218) target = $region32
      $region31: #{actor_critic_evaluate.1} parent=11 // pred_region
        _
      $region32: #{actor_critic_evaluate.1} parent=11 // pred_fallthru
        _
      // Predicated region
      $region33: #{actor_critic_evaluate.1} parent=11 // pred_check
        %p221 = pneg %p165
      $region34: #{actor_critic_evaluate.1} parent=11 // pred_check_branch
        %223 = sbr.rel (%p221) target = $region36
      $region35: #{actor_critic_evaluate.1} parent=11 // pred_region
        _
      $region36: #{actor_critic_evaluate.1} parent=11 // pred_fallthru
        _
    $region12: #{actor_critic_evaluate.1} parent=5 // pred_fallthru
      _
    %p224 = scmp.lt.s32.totalorder %s13, 2
    // Predicated region
    $region37: #{actor_critic_evaluate.1} parent=5 // pred_check
      %p225 = pneg %p224
    $region38: #{actor_critic_evaluate.1} parent=5 // pred_check_branch
      %227 = sbr.rel (%p225) target = $region40
    $region39: #{actor_critic_evaluate.1} parent=5 // pred_region
      // Predicated region
      $region41: #{actor_critic_evaluate.1} parent=39 // pred_check
        %p228 = pneg %p33
      $region42: #{actor_critic_evaluate.1} parent=39 // pred_check_branch
        %230 = sbr.rel (%p228) target = $region44
      $region43: #{actor_critic_evaluate.1} parent=39 // pred_region
        %s231 = smul.u32 16, %s13
        %p232 = scmp.lt.s32.totalorder %s231, 31
        %s233 = scalar_select %p232, %s231, 31
        %s234 = smul.addr %s233, 8
        %s235 = scalar_lea.vmem %s0, %s234
        %s236 = smul.u32 16, %s13
      $region44: #{actor_critic_evaluate.1} parent=39 // pred_fallthru
        _
    $region40: #{actor_critic_evaluate.1} parent=5 // pred_fallthru
      _
    %p237 = scmp.le.s32.totalorder 1, %s13
    %p238 = scmp.lt.s32.totalorder %s13, 3
    %p239 = pnand %p237, %p238
    %p240 = pneg %p239
    // Predicated region
    $region45: #{actor_critic_evaluate.1} parent=5 // pred_check
      _
    $region46: #{actor_critic_evaluate.1} parent=5 // pred_check_branch
      %242 = sbr.rel (%p239) target = $region48
    $region47: #{actor_critic_evaluate.1} parent=5 // pred_region
      %s243 = ssub.s32 %s13, 1
      %s244 = smul.u32 16, %s18
      %p245 = scmp.lt.s32.totalorder %s244, 31
      %s246 = scalar_select %p245, %s244, 31
      %s247 = smul.addr %s246, 8
      %s248 = scalar_lea.vmem %s0, %s247
      %p249 = pneg %p39
      %p250 = pneg %p36
      %p251 = pneg %p60
      %p252 = pneg %p57
      %p253 = pneg %p81
      %p254 = pneg %p78
      %p255 = pneg %p102
      %p256 = pneg %p99
      %p257 = pneg %p123
      %p258 = pneg %p120
      %p259 = pneg %p144
      %p260 = pneg %p141
      %p261 = pneg %p165
      %p262 = pneg %p162
      %p263 = pneg %p191
      %p264 = pneg %p188
      %s265 = smul.u32 16, %s18
      %p266 = scmp.lt.s32.totalorder %s265, 31
      %s267 = scalar_select %p266, %s265, 31
      %s268 = smul.addr %s267, 8
      %s269 = scalar_lea.vmem %s7, %s268
      %s270 = smul.u32 16, %s18
      %p271 = scmp.lt.s32.totalorder %s270, 31
      %s272 = scalar_select %p271, %s270, 31
      %s273 = smul.addr %s272, 8
      %s274 = scalar_lea.vmem %s0, %s273
      %s275 = smul.u32 16, %s18
      %s276 = smul.u32 16, %s18
      %p277 = scmp.lt.s32.totalorder %s276, 31
      %s278 = scalar_select %p277, %s276, 31
      %s279 = smul.addr %s278, 8
      %s280 = scalar_lea.vmem %s7, %s279
      %s281 = smul.u32 16, %s18
      %v282 = vld [vmem:[%s274] sm:$0xff]
      %v283 = vld [vmem:[%s274 + $0x8] sm:$0xff]
      %v284 = vld [vmem:[%s274 + $0x10] sm:$0xff]
      %v285 = vld [vmem:[%s274 + $0x18] sm:$0xff]
      %v286 = vld [vmem:[%s274 + $0x20] sm:$0xff]
      %v287 = vld [vmem:[%s274 + $0x28] sm:$0xff]
      %v288 = vld [vmem:[%s274 + $0x30] sm:$0xff]
      %v289 = vld [vmem:[%s274 + $0x38] sm:$0xff]
      %v290 = vld [vmem:[%s274 + $0x40] sm:$0xff]
      %v291 = vld [vmem:[%s274 + $0x48] sm:$0xff]
      %v292 = vld [vmem:[%s274 + $0x50] sm:$0xff]
      %v293 = vld [vmem:[%s274 + $0x58] sm:$0xff]
      %v294 = vld [vmem:[%s274 + $0x60] sm:$0xff]
      %v295 = vld [vmem:[%s274 + $0x68] sm:$0xff]
      %v296 = vld [vmem:[%s274 + $0x70] sm:$0xff]
      %v297 = vld [vmem:[%s274 + $0x78] sm:$0xff]
      %v298 = vcvt.f32.s32.to.zero.pseudo %v282
      %v299 = vcvt.f32.s32.to.zero.pseudo %v283
      %v300 = vcvt.f32.s32.to.zero.pseudo %v284
      %v301 = vcvt.f32.s32.to.zero.pseudo %v285
      %v302 = vcvt.f32.s32.to.zero.pseudo %v286
      %v303 = vcvt.f32.s32.to.zero.pseudo %v287
      %v304 = vcvt.f32.s32.to.zero.pseudo %v288
      %v305 = vcvt.f32.s32.to.zero.pseudo %v289
      %v306 = vcvt.f32.s32.to.zero.pseudo %v290
      %v307 = vcvt.f32.s32.to.zero.pseudo %v291
      %v308 = vcvt.f32.s32.to.zero.pseudo %v292
      %v309 = vcvt.f32.s32.to.zero.pseudo %v293
      %v310 = vcvt.f32.s32.to.zero.pseudo %v294
      %v311 = vcvt.f32.s32.to.zero.pseudo %v295
      %v312 = vcvt.f32.s32.to.zero.pseudo %v296
      %v313 = vcvt.f32.s32.to.zero.pseudo %v297
      %v314 = vld [vmem:[%s1] sm:$0x1f]
      %v315 = vld [vmem:[%s2] sm:$0x1]
      %v317 = vlaneseq
      %v318 = vshrl.u32 %v317, 7
      %v319 = vsub.s32 0, %v318
      %v320 = vrot.slane %v315, %v319
      %vm322 = vcmask 39936
      %v324 = vsel %vm322, %v282, 0
      %v327 = vsel %vm322, %v283, 0
      %v330 = vsel %vm322, %v284, 0
      %v333 = vsel %vm322, %v285, 0
      %v336 = vsel %vm322, %v286, 0
      %v339 = vsel %vm322, %v287, 0
      %v342 = vsel %vm322, %v288, 0
      %v345 = vsel %vm322, %v289, 0
      %v348 = vsel %vm322, %v290, 0
      %v351 = vsel %vm322, %v291, 0
      %v354 = vsel %vm322, %v292, 0
      %v357 = vsel %vm322, %v293, 0
      %v360 = vsel %vm322, %v294, 0
      %v363 = vsel %vm322, %v295, 0
      %v366 = vsel %vm322, %v296, 0
      %v369 = vsel %vm322, %v297, 0
      %vm371 = vcmask 1044480
      %v373 = vsel %vm371, %v314, 0
      %375 = vmatprep.subr.mxu0 0.0
      %376 = vmatpush1.msra.mxu0 %v373
      %377 = vmatprep.subr.mxu0 0.0
      %378 = vmatpush1.msra.mxu0 0.0
      %379 = vmatprep.subr.mxu0 0.0
      %380 = vmatpush1.msra.mxu0 0.0
      %381 = vmatprep.subr.mxu0 0.0
      %382 = vmatpush1.msra.mxu0 0.0
      %383 = vmatprep.subr.mxu0 0.0
      %384 = vmatpush1.msra.mxu0 0.0
      %385 = vmatprep.subr.mxu0 0.0
      %386 = vmatpush1.msra.mxu0 0.0
      %387 = vmatprep.subr.mxu0 0.0
      %388 = vmatpush1.msra.mxu0 0.0
      %389 = vmatprep.subr.mxu0 0.0
      %390 = vmatpush1.msra.mxu0 0.0
      %391 = vmatprep.subr.mxu0 0.0
      %392 = vmatpush1.msra.mxu0 0.0
      %393 = vmatprep.subr.mxu0 0.0
      %394 = vmatpush1.msra.mxu0 0.0
      %395 = vmatprep.subr.mxu0 0.0
      %396 = vmatpush1.msra.mxu0 0.0
      %397 = vmatprep.subr.mxu0 0.0
      %398 = vmatpush1.msra.mxu0 0.0
      %399 = vmatprep.subr.mxu0 0.0
      %400 = vmatpush1.msra.mxu0 0.0
      %401 = vmatprep.subr.mxu0 0.0
      %402 = vmatpush1.msra.mxu0 0.0
      %403 = vmatprep.subr.mxu0 0.0
      %404 = vmatpush1.msra.mxu0 0.0
      %405 = vmatprep.subr.mxu0 0.0
      %406 = vmatpush1.msra.mxu0 0.0
      %407 = vmatprep.subr.mxu0 0.0
      %408 = vmatpush1.msra.mxu0 0.0
      %409 = vmatprep.subr.mxu0 0.0
      %410 = vmatpush1.msra.mxu0 0.0
      %411 = vmatprep.subr.mxu0 0.0
      %412 = vmatpush1.msra.mxu0 0.0
      %413 = vmatprep.subr.mxu0 0.0
      %414 = vmatpush1.msra.mxu0 0.0
      %415 = vmatprep.subr.mxu0 0.0
      %416 = vmatpush1.msra.mxu0 0.0
      %417 = vmatprep.subr.mxu0 0.0
      %418 = vmatpush1.msra.mxu0 0.0
      %419 = vmatprep.subr.mxu0 0.0
      %420 = vmatpush1.msra.mxu0 0.0
      %421 = vmatprep.subr.mxu0 0.0
      %422 = vmatpush1.msra.mxu0 0.0
      %423 = vmatprep.subr.mxu0 0.0
      %424 = vmatpush1.msra.mxu0 0.0
      %425 = vmatprep.subr.mxu0 0.0
      %426 = vmatpush1.msra.mxu0 0.0
      %427 = vmatprep.subr.mxu0 0.0
      %428 = vmatpush1.msra.mxu0 0.0
      %429 = vmatprep.subr.mxu0 0.0
      %430 = vmatpush1.msra.mxu0 0.0
      %431 = vmatprep.subr.mxu0 0.0
      %432 = vmatpush1.msra.mxu0 0.0
      %433 = vmatprep.subr.mxu0 0.0
      %434 = vmatpush1.msra.mxu0 0.0
      %435 = vmatprep.subr.mxu0 0.0
      %436 = vmatpush1.msra.mxu0 0.0
      %437 = vmatprep.subr.mxu0 0.0
      %438 = vmatpush1.msra.mxu0 0.0
      %439 = vmatprep.mubr.f32.mxu0 0.0
      %440 = vmatmul.mubr.f32.gmra.mrb[0].mxu0 %v324
      %v441 = vpop.f32.mrb[0].mxu0
      %v442 = vadd.f32 %v320, %v441
      %v443 = vpop.f32.mrb[0].mxu0
      %444 = vmatprep.mubr.f32.mxu0 0.0
      %445 = vmatmul.mubr.f32.gmra.mrb[0].mxu0 %v327
      %v446 = vpop.f32.mrb[0].mxu0
      %v447 = vadd.f32 %v320, %v446
      %v448 = vpop.f32.mrb[0].mxu0
      %449 = vmatprep.mubr.f32.mxu0 0.0
      %450 = vmatmul.mubr.f32.gmra.mrb[0].mxu0 %v330
      %v451 = vpop.f32.mrb[0].mxu0
      %v452 = vadd.f32 %v320, %v451
      %v453 = vpop.f32.mrb[0].mxu0
      %454 = vmatprep.mubr.f32.mxu0 0.0
      %455 = vmatmul.mubr.f32.gmra.mrb[0].mxu0 %v333
      %v456 = vpop.f32.mrb[0].mxu0
      %v457 = vadd.f32 %v320, %v456
      %v458 = vpop.f32.mrb[0].mxu0
      %459 = vmatprep.mubr.f32.mxu0 0.0
      %460 = vmatmul.mubr.f32.gmra.mrb[0].mxu0 %v336
      %v461 = vpop.f32.mrb[0].mxu0
      %v462 = vadd.f32 %v320, %v461
      %v463 = vpop.f32.mrb[0].mxu0
      %464 = vmatprep.mubr.f32.mxu0 0.0
      %465 = vmatmul.mubr.f32.gmra.mrb[0].mxu0 %v339
      %v466 = vpop.f32.mrb[0].mxu0
      %v467 = vadd.f32 %v320, %v466
      %v468 = vpop.f32.mrb[0].mxu0
      %469 = vmatprep.mubr.f32.mxu0 0.0
      %470 = vmatmul.mubr.f32.gmra.mrb[0].mxu0 %v342
      %v471 = vpop.f32.mrb[0].mxu0
      %v472 = vadd.f32 %v320, %v471
      %v473 = vpop.f32.mrb[0].mxu0
      %474 = vmatprep.mubr.f32.mxu0 0.0
      %475 = vmatmul.mubr.f32.gmra.mrb[0].mxu0 %v345
      %v476 = vpop.f32.mrb[0].mxu0
      %v477 = vadd.f32 %v320, %v476
      %v478 = vpop.f32.mrb[0].mxu0
      %479 = vmatprep.mubr.f32.mxu0 0.0
      %480 = vmatmul.mubr.f32.gmra.mrb[0].mxu0 %v348
      %v481 = vpop.f32.mrb[0].mxu0
      %v482 = vadd.f32 %v320, %v481
      %v483 = vpop.f32.mrb[0].mxu0
      %484 = vmatprep.mubr.f32.mxu0 0.0
      %485 = vmatmul.mubr.f32.gmra.mrb[0].mxu0 %v351
      %v486 = vpop.f32.mrb[0].mxu0
      %v487 = vadd.f32 %v320, %v486
      %v488 = vpop.f32.mrb[0].mxu0
      %489 = vmatprep.mubr.f32.mxu0 0.0
      %490 = vmatmul.mubr.f32.gmra.mrb[0].mxu0 %v354
      %v491 = vpop.f32.mrb[0].mxu0
      %v492 = vadd.f32 %v320, %v491
      %v493 = vpop.f32.mrb[0].mxu0
      %494 = vmatprep.mubr.f32.mxu0 0.0
      %495 = vmatmul.mubr.f32.gmra.mrb[0].mxu0 %v357
      %v496 = vpop.f32.mrb[0].mxu0
      %v497 = vadd.f32 %v320, %v496
      %v498 = vpop.f32.mrb[0].mxu0
      %499 = vmatprep.mubr.f32.mxu0 0.0
      %500 = vmatmul.mubr.f32.gmra.mrb[0].mxu0 %v360
      %v501 = vpop.f32.mrb[0].mxu0
      %v502 = vadd.f32 %v320, %v501
      %v503 = vpop.f32.mrb[0].mxu0
      %504 = vmatprep.mubr.f32.mxu0 0.0
      %505 = vmatmul.mubr.f32.gmra.mrb[0].mxu0 %v363
      %v506 = vpop.f32.mrb[0].mxu0
      %v507 = vadd.f32 %v320, %v506
      %v508 = vpop.f32.mrb[0].mxu0
      %509 = vmatprep.mubr.f32.mxu0 0.0
      %510 = vmatmul.mubr.f32.gmra.mrb[0].mxu0 %v366
      %v511 = vpop.f32.mrb[0].mxu0
      %v512 = vadd.f32 %v320, %v511
      %v513 = vpop.f32.mrb[0].mxu0
      %514 = vmatprep.mubr.f32.mxu0 0.0
      %515 = vmatmul.mubr.f32.gmra.mrb[0].mxu0 %v369
      %v516 = vpop.f32.mrb[0].mxu0
      %v517 = vadd.f32 %v320, %v516
      %v518 = vpop.f32.mrb[0].mxu0
      %519 = vdwg.mxu0
      %v520 = vtanh.pop %v442
      %v521 = vtanh.pop %v447
      %v522 = vtanh.pop %v452
      %v523 = vtanh.pop %v457
      %v524 = vtanh.pop %v462
      %v525 = vtanh.pop %v467
      %v526 = vtanh.pop %v472
      %v527 = vtanh.pop %v477
      %v528 = vtanh.pop %v482
      %v529 = vtanh.pop %v487
      %v530 = vtanh.pop %v492
      %v531 = vtanh.pop %v497
      %v532 = vtanh.pop %v502
      %v533 = vtanh.pop %v507
      %v534 = vtanh.pop %v512
      %v535 = vtanh.pop %v517
      %v536 = vld [vmem:[%s3] sm:$0xff]
      %v537 = vld [vmem:[%s3 + $0x8] sm:$0xff]
      %v538 = vld [vmem:[%s3 + $0x10] sm:$0xff]
      %v539 = vld [vmem:[%s3 + $0x18] sm:$0xff]
      %v540 = vld [vmem:[%s3 + $0x20] sm:$0xff]
      %v541 = vld [vmem:[%s3 + $0x28] sm:$0xff]
      %v542 = vld [vmem:[%s3 + $0x30] sm:$0xff]
      %v543 = vld [vmem:[%s3 + $0x38] sm:$0xff]
      %v544 = vld [vmem:[%s4] sm:$0x1]
      %v546 = vlaneseq
      %v547 = vshrl.u32 %v546, 7
      %v548 = vsub.s32 0, %v547
      %v549 = vrot.slane %v544, %v548
      %vm551 = vcmask 523264
      %v553 = vsel %vm551, %v520, 0
      %v556 = vsel %vm551, %v521, 0
      %v559 = vsel %vm551, %v522, 0
      %v562 = vsel %vm551, %v523, 0
      %v565 = vsel %vm551, %v524, 0
      %v568 = vsel %vm551, %v525, 0
      %v571 = vsel %vm551, %v526, 0
      %v574 = vsel %vm551, %v527, 0
      %v577 = vsel %vm551, %v528, 0
      %v580 = vsel %vm551, %v529, 0
      %v583 = vsel %vm551, %v530, 0
      %v586 = vsel %vm551, %v531, 0
      %v589 = vsel %vm551, %v532, 0
      %v592 = vsel %vm551, %v533, 0
      %v595 = vsel %vm551, %v534, 0
      %v598 = vsel %vm551, %v535, 0
      %600 = vmatprep.subr.mxu0 0.0
      %601 = vmatpush1.msra.mxu0 %v536
      %602 = vmatprep.subr.mxu0 0.0
      %603 = vmatpush1.msra.mxu0 %v537
      %604 = vmatprep.subr.mxu0 0.0
      %605 = vmatpush1.msra.mxu0 %v538
      %606 = vmatprep.subr.mxu0 0.0
      %607 = vmatpush1.msra.mxu0 %v539
      %608 = vmatprep.subr.mxu0 0.0
      %609 = vmatpush1.msra.mxu0 %v540
      %610 = vmatprep.subr.mxu0 0.0
      %611 = vmatpush1.msra.mxu0 %v541
      %612 = vmatprep.subr.mxu0 0.0
      %613 = vmatpush1.msra.mxu0 %v542
      %614 = vmatprep.subr.mxu0 0.0
      %615 = vmatpush1.msra.mxu0 %v543
      %616 = vmatprep.subr.mxu0 0.0
      %617 = vmatpush1.msra.mxu0 0.0
      %618 = vmatprep.subr.mxu0 0.0
      %619 = vmatpush1.msra.mxu0 0.0
      %620 = vmatprep.subr.mxu0 0.0
      %621 = vmatpush1.msra.mxu0 0.0
      %622 = vmatprep.subr.mxu0 0.0
      %623 = vmatpush1.msra.mxu0 0.0
      %624 = vmatprep.subr.mxu0 0.0
      %625 = vmatpush1.msra.mxu0 0.0
      %626 = vmatprep.subr.mxu0 0.0
      %627 = vmatpush1.msra.mxu0 0.0
      %628 = vmatprep.subr.mxu0 0.0
      %629 = vmatpush1.msra.mxu0 0.0
      %630 = vmatprep.subr.mxu0 0.0
      %631 = vmatpush1.msra.mxu0 0.0
      %632 = vmatprep.subr.mxu0 0.0
      %633 = vmatpush1.msra.mxu0 0.0
      %634 = vmatprep.subr.mxu0 0.0
      %635 = vmatpush1.msra.mxu0 0.0
      %636 = vmatprep.subr.mxu0 0.0
      %637 = vmatpush1.msra.mxu0 0.0
      %638 = vmatprep.subr.mxu0 0.0
      %639 = vmatpush1.msra.mxu0 0.0
      %640 = vmatprep.subr.mxu0 0.0
      %641 = vmatpush1.msra.mxu0 0.0
      %642 = vmatprep.subr.mxu0 0.0
      %643 = vmatpush1.msra.mxu0 0.0
      %644 = vmatprep.subr.mxu0 0.0
      %645 = vmatpush1.msra.mxu0 0.0
      %646 = vmatprep.subr.mxu0 0.0
      %647 = vmatpush1.msra.mxu0 0.0
      %648 = vmatprep.subr.mxu0 0.0
      %649 = vmatpush1.msra.mxu0 0.0
      %650 = vmatprep.subr.mxu0 0.0
      %651 = vmatpush1.msra.mxu0 0.0
      %652 = vmatprep.subr.mxu0 0.0
      %653 = vmatpush1.msra.mxu0 0.0
      %654 = vmatprep.subr.mxu0 0.0
      %655 = vmatpush1.msra.mxu0 0.0
      %656 = vmatprep.subr.mxu0 0.0
      %657 = vmatpush1.msra.mxu0 0.0
      %658 = vmatprep.subr.mxu0 0.0
      %659 = vmatpush1.msra.mxu0 0.0
      %660 = vmatprep.subr.mxu0 0.0
      %661 = vmatpush1.msra.mxu0 0.0
      %662 = vmatprep.subr.mxu0 0.0
      %663 = vmatpush1.msra.mxu0 0.0
      %664 = vmatprep.mubr.f32.mxu0 0.0
      %665 = vmatmul.mubr.f32.gmra.mrb[0].mxu0 %v553
      %v666 = vpop.f32.mrb[0].mxu0
      %v667 = vadd.f32 %v549, %v666
      %v668 = vpop.f32.mrb[0].mxu0
      %669 = vmatprep.mubr.f32.mxu0 0.0
      %670 = vmatmul.mubr.f32.gmra.mrb[0].mxu0 %v556
      %v671 = vpop.f32.mrb[0].mxu0
      %v672 = vadd.f32 %v549, %v671
      %v673 = vpop.f32.mrb[0].mxu0
      %674 = vmatprep.mubr.f32.mxu0 0.0
      %675 = vmatmul.mubr.f32.gmra.mrb[0].mxu0 %v559
      %v676 = vpop.f32.mrb[0].mxu0
      %v677 = vadd.f32 %v549, %v676
      %v678 = vpop.f32.mrb[0].mxu0
      %679 = vmatprep.mubr.f32.mxu0 0.0
      %680 = vmatmul.mubr.f32.gmra.mrb[0].mxu0 %v562
      %v681 = vpop.f32.mrb[0].mxu0
      %v682 = vadd.f32 %v549, %v681
      %v683 = vpop.f32.mrb[0].mxu0
      %684 = vmatprep.mubr.f32.mxu0 0.0
      %685 = vmatmul.mubr.f32.gmra.mrb[0].mxu0 %v565
      %v686 = vpop.f32.mrb[0].mxu0
      %v687 = vadd.f32 %v549, %v686
      %v688 = vpop.f32.mrb[0].mxu0
      %689 = vmatprep.mubr.f32.mxu0 0.0
      %690 = vmatmul.mubr.f32.gmra.mrb[0].mxu0 %v568
      %v691 = vpop.f32.mrb[0].mxu0
      %v692 = vadd.f32 %v549, %v691
      %v693 = vpop.f32.mrb[0].mxu0
      %694 = vmatprep.mubr.f32.mxu0 0.0
      %695 = vmatmul.mubr.f32.gmra.mrb[0].mxu0 %v571
      %v696 = vpop.f32.mrb[0].mxu0
      %v697 = vadd.f32 %v549, %v696
      %v698 = vpop.f32.mrb[0].mxu0
      %699 = vmatprep.mubr.f32.mxu0 0.0
      %700 = vmatmul.mubr.f32.gmra.mrb[0].mxu0 %v574
      %v701 = vpop.f32.mrb[0].mxu0
      %v702 = vadd.f32 %v549, %v701
      %v703 = vpop.f32.mrb[0].mxu0
      %704 = vmatprep.mubr.f32.mxu0 0.0
      %705 = vmatmul.mubr.f32.gmra.mrb[0].mxu0 %v577
      %v706 = vpop.f32.mrb[0].mxu0
      %v707 = vadd.f32 %v549, %v706
      %v708 = vpop.f32.mrb[0].mxu0
      %709 = vmatprep.mubr.f32.mxu0 0.0
      %710 = vmatmul.mubr.f32.gmra.mrb[0].mxu0 %v580
      %v711 = vpop.f32.mrb[0].mxu0
      %v712 = vadd.f32 %v549, %v711
      %v713 = vpop.f32.mrb[0].mxu0
      %714 = vmatprep.mubr.f32.mxu0 0.0
      %715 = vmatmul.mubr.f32.gmra.mrb[0].mxu0 %v583
      %v716 = vpop.f32.mrb[0].mxu0
      %v717 = vadd.f32 %v549, %v716
      %v718 = vpop.f32.mrb[0].mxu0
      %719 = vmatprep.mubr.f32.mxu0 0.0
      %720 = vmatmul.mubr.f32.gmra.mrb[0].mxu0 %v586
      %v721 = vpop.f32.mrb[0].mxu0
      %v722 = vadd.f32 %v549, %v721
      %v723 = vpop.f32.mrb[0].mxu0
      %724 = vmatprep.mubr.f32.mxu0 0.0
      %725 = vmatmul.mubr.f32.gmra.mrb[0].mxu0 %v589
      %v726 = vpop.f32.mrb[0].mxu0
      %v727 = vadd.f32 %v549, %v726
      %v728 = vpop.f32.mrb[0].mxu0
      %729 = vmatprep.mubr.f32.mxu0 0.0
      %730 = vmatmul.mubr.f32.gmra.mrb[0].mxu0 %v592
      %v731 = vpop.f32.mrb[0].mxu0
      %v732 = vadd.f32 %v549, %v731
      %v733 = vpop.f32.mrb[0].mxu0
      %734 = vmatprep.mubr.f32.mxu0 0.0
      %735 = vmatmul.mubr.f32.gmra.mrb[0].mxu0 %v595
      %v736 = vpop.f32.mrb[0].mxu0
      %v737 = vadd.f32 %v549, %v736
      %v738 = vpop.f32.mrb[0].mxu0
      %739 = vmatprep.mubr.f32.mxu0 0.0
      %740 = vmatmul.mubr.f32.gmra.mrb[0].mxu0 %v598
      %v741 = vpop.f32.mrb[0].mxu0
      %v742 = vadd.f32 %v549, %v741
      %v743 = vpop.f32.mrb[0].mxu0
      %744 = vdwg.mxu0
      %v745 = vtanh.pop %v667
      %v746 = vtanh.pop %v672
      %v747 = vtanh.pop %v677
      %v748 = vtanh.pop %v682
      %v749 = vtanh.pop %v687
      %v750 = vtanh.pop %v692
      %v751 = vtanh.pop %v697
      %v752 = vtanh.pop %v702
      %v753 = vtanh.pop %v707
      %v754 = vtanh.pop %v712
      %v755 = vtanh.pop %v717
      %v756 = vtanh.pop %v722
      %v757 = vtanh.pop %v727
      %v758 = vtanh.pop %v732
      %v759 = vtanh.pop %v737
      %v760 = vtanh.pop %v742
      %v761 = vld [vmem:[%s5] sm:$0xff]
      %v762 = vld [vmem:[%s5 + $0x8] sm:$0xff]
      %v763 = vld [vmem:[%s5 + $0x10] sm:$0xff]
      %v764 = vld [vmem:[%s5 + $0x18] sm:$0xff]
      %v765 = vld [vmem:[%s5 + $0x20] sm:$0xff]
      %v766 = vld [vmem:[%s5 + $0x28] sm:$0xff]
      %v767 = vld [vmem:[%s5 + $0x30] sm:$0xff]
      %v768 = vld [vmem:[%s5 + $0x38] sm:$0xff]
      %v769 = vld [vmem:[%s6] sm:$0x1]
      %v771 = vlaneseq
      %v772 = vshrl.u32 %v771, 7
      %v773 = vsub.s32 0, %v772
      %v774 = vrot.slane %v769, %v773
      %v777 = vsel %vm551, %v745, 0
      %v780 = vsel %vm551, %v746, 0
      %v783 = vsel %vm551, %v747, 0
      %v786 = vsel %vm551, %v748, 0
      %v789 = vsel %vm551, %v749, 0
      %v792 = vsel %vm551, %v750, 0
      %v795 = vsel %vm551, %v751, 0
      %v798 = vsel %vm551, %v752, 0
      %v801 = vsel %vm551, %v753, 0
      %v804 = vsel %vm551, %v754, 0
      %v807 = vsel %vm551, %v755, 0
      %v810 = vsel %vm551, %v756, 0
      %v813 = vsel %vm551, %v757, 0
      %v816 = vsel %vm551, %v758, 0
      %v819 = vsel %vm551, %v759, 0
      %v822 = vsel %vm551, %v760, 0
      %824 = vmatprep.subr.mxu0 0.0
      %825 = vmatpush1.msra.mxu0 %v761
      %826 = vmatprep.subr.mxu0 0.0
      %827 = vmatpush1.msra.mxu0 %v762
      %828 = vmatprep.subr.mxu0 0.0
      %829 = vmatpush1.msra.mxu0 %v763
      %830 = vmatprep.subr.mxu0 0.0
      %831 = vmatpush1.msra.mxu0 %v764
      %832 = vmatprep.subr.mxu0 0.0
      %833 = vmatpush1.msra.mxu0 %v765
      %834 = vmatprep.subr.mxu0 0.0
      %835 = vmatpush1.msra.mxu0 %v766
      %836 = vmatprep.subr.mxu0 0.0
      %837 = vmatpush1.msra.mxu0 %v767
      %838 = vmatprep.subr.mxu0 0.0
      %839 = vmatpush1.msra.mxu0 %v768
      %840 = vmatprep.subr.mxu0 0.0
      %841 = vmatpush1.msra.mxu0 0.0
      %842 = vmatprep.subr.mxu0 0.0
      %843 = vmatpush1.msra.mxu0 0.0
      %844 = vmatprep.subr.mxu0 0.0
      %845 = vmatpush1.msra.mxu0 0.0
      %846 = vmatprep.subr.mxu0 0.0
      %847 = vmatpush1.msra.mxu0 0.0
      %848 = vmatprep.subr.mxu0 0.0
      %849 = vmatpush1.msra.mxu0 0.0
      %850 = vmatprep.subr.mxu0 0.0
      %851 = vmatpush1.msra.mxu0 0.0
      %852 = vmatprep.subr.mxu0 0.0
      %853 = vmatpush1.msra.mxu0 0.0
      %854 = vmatprep.subr.mxu0 0.0
      %855 = vmatpush1.msra.mxu0 0.0
      %856 = vmatprep.subr.mxu0 0.0
      %857 = vmatpush1.msra.mxu0 0.0
      %858 = vmatprep.subr.mxu0 0.0
      %859 = vmatpush1.msra.mxu0 0.0
      %860 = vmatprep.subr.mxu0 0.0
      %861 = vmatpush1.msra.mxu0 0.0
      %862 = vmatprep.subr.mxu0 0.0
      %863 = vmatpush1.msra.mxu0 0.0
      %864 = vmatprep.subr.mxu0 0.0
      %865 = vmatpush1.msra.mxu0 0.0
      %866 = vmatprep.subr.mxu0 0.0
      %867 = vmatpush1.msra.mxu0 0.0
      %868 = vmatprep.subr.mxu0 0.0
      %869 = vmatpush1.msra.mxu0 0.0
      %870 = vmatprep.subr.mxu0 0.0
      %871 = vmatpush1.msra.mxu0 0.0
      %872 = vmatprep.subr.mxu0 0.0
      %873 = vmatpush1.msra.mxu0 0.0
      %874 = vmatprep.subr.mxu0 0.0
      %875 = vmatpush1.msra.mxu0 0.0
      %876 = vmatprep.subr.mxu0 0.0
      %877 = vmatpush1.msra.mxu0 0.0
      %878 = vmatprep.subr.mxu0 0.0
      %879 = vmatpush1.msra.mxu0 0.0
      %880 = vmatprep.subr.mxu0 0.0
      %881 = vmatpush1.msra.mxu0 0.0
      %882 = vmatprep.subr.mxu0 0.0
      %883 = vmatpush1.msra.mxu0 0.0
      %884 = vmatprep.subr.mxu0 0.0
      %885 = vmatpush1.msra.mxu0 0.0
      %886 = vmatprep.subr.mxu0 0.0
      %887 = vmatpush1.msra.mxu0 0.0
      %888 = vmatprep.mubr.f32.mxu0 0.0
      %889 = vmatmul.mubr.f32.gmra.mrb[0].mxu0 %v777
      %v890 = vpop.f32.mrb[0].mxu0
      %v891 = vadd.f32 %v774, %v890
      %v892 = vpop.f32.mrb[0].mxu0
      %893 = vmatprep.mubr.f32.mxu0 0.0
      %894 = vmatmul.mubr.f32.gmra.mrb[0].mxu0 %v780
      %v895 = vpop.f32.mrb[0].mxu0
      %v896 = vadd.f32 %v774, %v895
      %v897 = vpop.f32.mrb[0].mxu0
      %898 = vmatprep.mubr.f32.mxu0 0.0
      %899 = vmatmul.mubr.f32.gmra.mrb[0].mxu0 %v783
      %v900 = vpop.f32.mrb[0].mxu0
      %v901 = vadd.f32 %v774, %v900
      %v902 = vpop.f32.mrb[0].mxu0
      %903 = vmatprep.mubr.f32.mxu0 0.0
      %904 = vmatmul.mubr.f32.gmra.mrb[0].mxu0 %v786
      %v905 = vpop.f32.mrb[0].mxu0
      %v906 = vadd.f32 %v774, %v905
      %v907 = vpop.f32.mrb[0].mxu0
      %908 = vmatprep.mubr.f32.mxu0 0.0
      %909 = vmatmul.mubr.f32.gmra.mrb[0].mxu0 %v789
      %v910 = vpop.f32.mrb[0].mxu0
      %v911 = vadd.f32 %v774, %v910
      %v912 = vpop.f32.mrb[0].mxu0
      %913 = vmatprep.mubr.f32.mxu0 0.0
      %914 = vmatmul.mubr.f32.gmra.mrb[0].mxu0 %v792
      %v915 = vpop.f32.mrb[0].mxu0
      %v916 = vadd.f32 %v774, %v915
      %v917 = vpop.f32.mrb[0].mxu0
      %918 = vmatprep.mubr.f32.mxu0 0.0
      %919 = vmatmul.mubr.f32.gmra.mrb[0].mxu0 %v795
      %v920 = vpop.f32.mrb[0].mxu0
      %v921 = vadd.f32 %v774, %v920
      %v922 = vpop.f32.mrb[0].mxu0
      %923 = vmatprep.mubr.f32.mxu0 0.0
      %924 = vmatmul.mubr.f32.gmra.mrb[0].mxu0 %v798
      %v925 = vpop.f32.mrb[0].mxu0
      %v926 = vadd.f32 %v774, %v925
      %v927 = vpop.f32.mrb[0].mxu0
      %928 = vmatprep.mubr.f32.mxu0 0.0
      %929 = vmatmul.mubr.f32.gmra.mrb[0].mxu0 %v801
      %v930 = vpop.f32.mrb[0].mxu0
      %v931 = vadd.f32 %v774, %v930
      %v932 = vpop.f32.mrb[0].mxu0
      %933 = vmatprep.mubr.f32.mxu0 0.0
      %934 = vmatmul.mubr.f32.gmra.mrb[0].mxu0 %v804
      %v935 = vpop.f32.mrb[0].mxu0
      %v936 = vadd.f32 %v774, %v935
      %v937 = vpop.f32.mrb[0].mxu0
      %938 = vmatprep.mubr.f32.mxu0 0.0
      %939 = vmatmul.mubr.f32.gmra.mrb[0].mxu0 %v807
      %v940 = vpop.f32.mrb[0].mxu0
      %v941 = vadd.f32 %v774, %v940
      %v942 = vpop.f32.mrb[0].mxu0
      %943 = vmatprep.mubr.f32.mxu0 0.0
      %944 = vmatmul.mubr.f32.gmra.mrb[0].mxu0 %v810
      %v945 = vpop.f32.mrb[0].mxu0
      %v946 = vadd.f32 %v774, %v945
      %v947 = vpop.f32.mrb[0].mxu0
      %948 = vmatprep.mubr.f32.mxu0 0.0
      %949 = vmatmul.mubr.f32.gmra.mrb[0].mxu0 %v813
      %v950 = vpop.f32.mrb[0].mxu0
      %v951 = vadd.f32 %v774, %v950
      %v952 = vpop.f32.mrb[0].mxu0
      %953 = vmatprep.mubr.f32.mxu0 0.0
      %954 = vmatmul.mubr.f32.gmra.mrb[0].mxu0 %v816
      %v955 = vpop.f32.mrb[0].mxu0
      %v956 = vadd.f32 %v774, %v955
      %v957 = vpop.f32.mrb[0].mxu0
      %958 = vmatprep.mubr.f32.mxu0 0.0
      %959 = vmatmul.mubr.f32.gmra.mrb[0].mxu0 %v819
      %v960 = vpop.f32.mrb[0].mxu0
      %v961 = vadd.f32 %v774, %v960
      %v962 = vpop.f32.mrb[0].mxu0
      %963 = vmatprep.mubr.f32.mxu0 0.0
      %964 = vmatmul.mubr.f32.gmra.mrb[0].mxu0 %v822
      %v965 = vpop.f32.mrb[0].mxu0
      %v966 = vadd.f32 %v774, %v965
      %v967 = vpop.f32.mrb[0].mxu0
      %968 = vdwg.mxu0
      %v969 = vlaneseq
      %v970 = vand.u32 %v969, 127
      %vm971 = vcmp.lt.s32.totalorder %v970, 2
      %v972 = vsel %vm971, %v891, -1e+30
      %v973 = vsel %vm971, %v896, -1e+30
      %v974 = vsel %vm971, %v901, -1e+30
      %v975 = vsel %vm971, %v906, -1e+30
      %v976 = vsel %vm971, %v911, -1e+30
      %v977 = vsel %vm971, %v916, -1e+30
      %v978 = vsel %vm971, %v921, -1e+30
      %v979 = vsel %vm971, %v926, -1e+30
      %v980 = vsel %vm971, %v931, -1e+30
      %v981 = vsel %vm971, %v936, -1e+30
      %v982 = vsel %vm971, %v941, -1e+30
      %v983 = vsel %vm971, %v946, -1e+30
      %v984 = vsel %vm971, %v951, -1e+30
      %v985 = vsel %vm971, %v956, -1e+30
      %v986 = vsel %vm971, %v961, -1e+30
      %v987 = vsel %vm971, %v966, -1e+30
      %988 = vmax.xlane.f32.xlu0 %v972
      %v989 = vpop.xlane.xlu0 %988
      %990 = vmax.xlane.f32.xlu0 %v973
      %v991 = vpop.xlane.xlu0 %990
      %992 = vmax.xlane.f32.xlu0 %v974
      %v993 = vpop.xlane.xlu0 %992
      %994 = vmax.xlane.f32.xlu0 %v975
      %v995 = vpop.xlane.xlu0 %994
      %996 = vmax.xlane.f32.xlu0 %v976
      %v997 = vpop.xlane.xlu0 %996
      %998 = vmax.xlane.f32.xlu0 %v977
      %v999 = vpop.xlane.xlu0 %998
      %1000 = vmax.xlane.f32.xlu0 %v978
      %v1001 = vpop.xlane.xlu0 %1000
      %1002 = vmax.xlane.f32.xlu0 %v979
      %v1003 = vpop.xlane.xlu0 %1002
      %1004 = vmax.xlane.f32.xlu0 %v980
      %v1005 = vpop.xlane.xlu0 %1004
      %1006 = vmax.xlane.f32.xlu0 %v981
      %v1007 = vpop.xlane.xlu0 %1006
      %1008 = vmax.xlane.f32.xlu0 %v982
      %v1009 = vpop.xlane.xlu0 %1008
      %1010 = vmax.xlane.f32.xlu0 %v983
      %v1011 = vpop.xlane.xlu0 %1010
      %1012 = vmax.xlane.f32.xlu0 %v984
      %v1013 = vpop.xlane.xlu0 %1012
      %1014 = vmax.xlane.f32.xlu0 %v985
      %v1015 = vpop.xlane.xlu0 %1014
      %1016 = vmax.xlane.f32.xlu0 %v986
      %v1017 = vpop.xlane.xlu0 %1016
      %1018 = vmax.xlane.f32.xlu0 %v987
      %v1019 = vpop.xlane.xlu0 %1018
      %v1020 = vsub.f32 %v972, %v989
      %v1021 = vsub.f32 %v973, %v991
      %v1022 = vsub.f32 %v974, %v993
      %v1023 = vsub.f32 %v975, %v995
      %v1024 = vsub.f32 %v976, %v997
      %v1025 = vsub.f32 %v977, %v999
      %v1026 = vsub.f32 %v978, %v1001
      %v1027 = vsub.f32 %v979, %v1003
      %v1028 = vsub.f32 %v980, %v1005
      %v1029 = vsub.f32 %v981, %v1007
      %v1030 = vsub.f32 %v982, %v1009
      %v1031 = vsub.f32 %v983, %v1011
      %v1032 = vsub.f32 %v984, %v1013
      %v1033 = vsub.f32 %v985, %v1015
      %v1034 = vsub.f32 %v986, %v1017
      %v1035 = vsub.f32 %v987, %v1019
      %v1036 = vmul.f32 %v1020, 1.442695
      %v1037 = vpow.pop %v1036
      %v1038 = vmul.f32 %v1021, 1.442695
      %v1039 = vpow.pop %v1038
      %v1040 = vmul.f32 %v1022, 1.442695
      %v1041 = vpow.pop %v1040
      %v1042 = vmul.f32 %v1023, 1.442695
      %v1043 = vpow.pop %v1042
      %v1044 = vmul.f32 %v1024, 1.442695
      %v1045 = vpow.pop %v1044
      %v1046 = vmul.f32 %v1025, 1.442695
      %v1047 = vpow.pop %v1046
      %v1048 = vmul.f32 %v1026, 1.442695
      %v1049 = vpow.pop %v1048
      %v1050 = vmul.f32 %v1027, 1.442695
      %v1051 = vpow.pop %v1050
      %v1052 = vmul.f32 %v1028, 1.442695
      %v1053 = vpow.pop %v1052
      %v1054 = vmul.f32 %v1029, 1.442695
      %v1055 = vpow.pop %v1054
      %v1056 = vmul.f32 %v1030, 1.442695
      %v1057 = vpow.pop %v1056
      %v1058 = vmul.f32 %v1031, 1.442695
      %v1059 = vpow.pop %v1058
      %v1060 = vmul.f32 %v1032, 1.442695
      %v1061 = vpow.pop %v1060
      %v1062 = vmul.f32 %v1033, 1.442695
      %v1063 = vpow.pop %v1062
      %v1064 = vmul.f32 %v1034, 1.442695
      %v1065 = vpow.pop %v1064
      %v1066 = vmul.f32 %v1035, 1.442695
      %v1067 = vpow.pop %v1066
      %v1068 = vsel %vm971, %v1037, 0.0
      %v1069 = vsel %vm971, %v1039, 0.0
      %v1070 = vsel %vm971, %v1041, 0.0
      %v1071 = vsel %vm971, %v1043, 0.0
      %v1072 = vsel %vm971, %v1045, 0.0
      %v1073 = vsel %vm971, %v1047, 0.0
      %v1074 = vsel %vm971, %v1049, 0.0
      %v1075 = vsel %vm971, %v1051, 0.0
      %v1076 = vsel %vm971, %v1053, 0.0
      %v1077 = vsel %vm971, %v1055, 0.0
      %v1078 = vsel %vm971, %v1057, 0.0
      %v1079 = vsel %vm971, %v1059, 0.0
      %v1080 = vsel %vm971, %v1061, 0.0
      %v1081 = vsel %vm971, %v1063, 0.0
      %v1082 = vsel %vm971, %v1065, 0.0
      %v1083 = vsel %vm971, %v1067, 0.0
      %1084 = vadd.xlane.f32.xlu0 %v1068
      %v1085 = vpop.xlane.xlu0 %1084
      %1086 = vadd.xlane.f32.xlu0 %v1069
      %v1087 = vpop.xlane.xlu0 %1086
      %1088 = vadd.xlane.f32.xlu0 %v1070
      %v1089 = vpop.xlane.xlu0 %1088
      %1090 = vadd.xlane.f32.xlu0 %v1071
      %v1091 = vpop.xlane.xlu0 %1090
      %1092 = vadd.xlane.f32.xlu0 %v1072
      %v1093 = vpop.xlane.xlu0 %1092
      %1094 = vadd.xlane.f32.xlu0 %v1073
      %v1095 = vpop.xlane.xlu0 %1094
      %1096 = vadd.xlane.f32.xlu0 %v1074
      %v1097 = vpop.xlane.xlu0 %1096
      %1098 = vadd.xlane.f32.xlu0 %v1075
      %v1099 = vpop.xlane.xlu0 %1098
      %1100 = vadd.xlane.f32.xlu0 %v1076
      %v1101 = vpop.xlane.xlu0 %1100
      %1102 = vadd.xlane.f32.xlu0 %v1077
      %v1103 = vpop.xlane.xlu0 %1102
      %1104 = vadd.xlane.f32.xlu0 %v1078
      %v1105 = vpop.xlane.xlu0 %1104
      %1106 = vadd.xlane.f32.xlu0 %v1079
      %v1107 = vpop.xlane.xlu0 %1106
      %1108 = vadd.xlane.f32.xlu0 %v1080
      %v1109 = vpop.xlane.xlu0 %1108
      %1110 = vadd.xlane.f32.xlu0 %v1081
      %v1111 = vpop.xlane.xlu0 %1110
      %1112 = vadd.xlane.f32.xlu0 %v1082
      %v1113 = vpop.xlane.xlu0 %1112
      %1114 = vadd.xlane.f32.xlu0 %v1083
      %v1115 = vpop.xlane.xlu0 %1114
      %v1116 = vrcp.pop %v1085
      %v1117 = vrcp.pop %v1087
      %v1118 = vrcp.pop %v1089
      %v1119 = vrcp.pop %v1091
      %v1120 = vrcp.pop %v1093
      %v1121 = vrcp.pop %v1095
      %v1122 = vrcp.pop %v1097
      %v1123 = vrcp.pop %v1099
      %v1124 = vrcp.pop %v1101
      %v1125 = vrcp.pop %v1103
      %v1126 = vrcp.pop %v1105
      %v1127 = vrcp.pop %v1107
      %v1128 = vrcp.pop %v1109
      %v1129 = vrcp.pop %v1111
      %v1130 = vrcp.pop %v1113
      %v1131 = vrcp.pop %v1115
      %v1132 = vmul.f32 %v1068, %v1116
      %v1133 = vmul.f32 %v1069, %v1117
      %v1134 = vmul.f32 %v1070, %v1118
      %v1135 = vmul.f32 %v1071, %v1119
      %v1136 = vmul.f32 %v1072, %v1120
      %v1137 = vmul.f32 %v1073, %v1121
      %v1138 = vmul.f32 %v1074, %v1122
      %v1139 = vmul.f32 %v1075, %v1123
      %v1140 = vmul.f32 %v1076, %v1124
      %v1141 = vmul.f32 %v1077, %v1125
      %v1142 = vmul.f32 %v1078, %v1126
      %v1143 = vmul.f32 %v1079, %v1127
      %v1144 = vmul.f32 %v1080, %v1128
      %v1145 = vmul.f32 %v1081, %v1129
      %v1146 = vmul.f32 %v1082, %v1130
      %v1147 = vmul.f32 %v1083, %v1131
      %v1148 = vlog2.pop %v1085
      %v1149 = vmul.f32 %v1148, 0.6931472
      %v1150 = vlog2.pop %v1087
      %v1151 = vmul.f32 %v1150, 0.6931472
      %v1152 = vlog2.pop %v1089
      %v1153 = vmul.f32 %v1152, 0.6931472
      %v1154 = vlog2.pop %v1091
      %v1155 = vmul.f32 %v1154, 0.6931472
      %v1156 = vlog2.pop %v1093
      %v1157 = vmul.f32 %v1156, 0.6931472
      %v1158 = vlog2.pop %v1095
      %v1159 = vmul.f32 %v1158, 0.6931472
      %v1160 = vlog2.pop %v1097
      %v1161 = vmul.f32 %v1160, 0.6931472
      %v1162 = vlog2.pop %v1099
      %v1163 = vmul.f32 %v1162, 0.6931472
      %v1164 = vlog2.pop %v1101
      %v1165 = vmul.f32 %v1164, 0.6931472
      %v1166 = vlog2.pop %v1103
      %v1167 = vmul.f32 %v1166, 0.6931472
      %v1168 = vlog2.pop %v1105
      %v1169 = vmul.f32 %v1168, 0.6931472
      %v1170 = vlog2.pop %v1107
      %v1171 = vmul.f32 %v1170, 0.6931472
      %v1172 = vlog2.pop %v1109
      %v1173 = vmul.f32 %v1172, 0.6931472
      %v1174 = vlog2.pop %v1111
      %v1175 = vmul.f32 %v1174, 0.6931472
      %v1176 = vlog2.pop %v1113
      %v1177 = vmul.f32 %v1176, 0.6931472
      %v1178 = vlog2.pop %v1115
      %v1179 = vmul.f32 %v1178, 0.6931472
      %v1180 = vsub.f32 %v1020, %v1149
      %v1181 = vsub.f32 %v1021, %v1151
      %v1182 = vsub.f32 %v1022, %v1153
      %v1183 = vsub.f32 %v1023, %v1155
      %v1184 = vsub.f32 %v1024, %v1157
      %v1185 = vsub.f32 %v1025, %v1159
      %v1186 = vsub.f32 %v1026, %v1161
      %v1187 = vsub.f32 %v1027, %v1163
      %v1188 = vsub.f32 %v1028, %v1165
      %v1189 = vsub.f32 %v1029, %v1167
      %v1190 = vsub.f32 %v1030, %v1169
      %v1191 = vsub.f32 %v1031, %v1171
      %v1192 = vsub.f32 %v1032, %v1173
      %v1193 = vsub.f32 %v1033, %v1175
      %v1194 = vsub.f32 %v1034, %v1177
      %v1195 = vsub.f32 %v1035, %v1179
      %v1196 = vsel %vm971, %v1180, 0.0
      %v1197 = vsel %vm971, %v1181, 0.0
      %v1198 = vsel %vm971, %v1182, 0.0
      %v1199 = vsel %vm971, %v1183, 0.0
      %v1200 = vsel %vm971, %v1184, 0.0
      %v1201 = vsel %vm971, %v1185, 0.0
      %v1202 = vsel %vm971, %v1186, 0.0
      %v1203 = vsel %vm971, %v1187, 0.0
      %v1204 = vsel %vm971, %v1188, 0.0
      %v1205 = vsel %vm971, %v1189, 0.0
      %v1206 = vsel %vm971, %v1190, 0.0
      %v1207 = vsel %vm971, %v1191, 0.0
      %v1208 = vsel %vm971, %v1192, 0.0
      %v1209 = vsel %vm971, %v1193, 0.0
      %v1210 = vsel %vm971, %v1194, 0.0
      %v1211 = vsel %vm971, %v1195, 0.0
      %1212 = vset.pattern.permute.xlu0 4
      %1213 = vperm.xlu0 %1212, %v298
      %v1214 = vpop.permute.xlu0 %1213
      %1215 = vset.pattern.permute.xlu0 4
      %1216 = vperm.xlu0 %1215, %v299
      %v1217 = vpop.permute.xlu0 %1216
      %1218 = vset.pattern.permute.xlu0 4
      %1219 = vperm.xlu0 %1218, %v300
      %v1220 = vpop.permute.xlu0 %1219
      %1221 = vset.pattern.permute.xlu0 4
      %1222 = vperm.xlu0 %1221, %v301
      %v1223 = vpop.permute.xlu0 %1222
      %1224 = vset.pattern.permute.xlu0 4
      %1225 = vperm.xlu0 %1224, %v302
      %v1226 = vpop.permute.xlu0 %1225
      %1227 = vset.pattern.permute.xlu0 4
      %1228 = vperm.xlu0 %1227, %v303
      %v1229 = vpop.permute.xlu0 %1228
      %1230 = vset.pattern.permute.xlu0 4
      %1231 = vperm.xlu0 %1230, %v304
      %v1232 = vpop.permute.xlu0 %1231
      %1233 = vset.pattern.permute.xlu0 4
      %1234 = vperm.xlu0 %1233, %v305
      %v1235 = vpop.permute.xlu0 %1234
      %1236 = vset.pattern.permute.xlu0 4
      %1237 = vperm.xlu0 %1236, %v306
      %v1238 = vpop.permute.xlu0 %1237
      %1239 = vset.pattern.permute.xlu0 4
      %1240 = vperm.xlu0 %1239, %v307
      %v1241 = vpop.permute.xlu0 %1240
      %1242 = vset.pattern.permute.xlu0 4
      %1243 = vperm.xlu0 %1242, %v308
      %v1244 = vpop.permute.xlu0 %1243
      %1245 = vset.pattern.permute.xlu0 4
      %1246 = vperm.xlu0 %1245, %v309
      %v1247 = vpop.permute.xlu0 %1246
      %1248 = vset.pattern.permute.xlu0 4
      %1249 = vperm.xlu0 %1248, %v310
      %v1250 = vpop.permute.xlu0 %1249
      %1251 = vset.pattern.permute.xlu0 4
      %1252 = vperm.xlu0 %1251, %v311
      %v1253 = vpop.permute.xlu0 %1252
      %1254 = vset.pattern.permute.xlu0 4
      %1255 = vperm.xlu0 %1254, %v312
      %v1256 = vpop.permute.xlu0 %1255
      %1257 = vset.pattern.permute.xlu0 4
      %1258 = vperm.xlu0 %1257, %v313
      %v1259 = vpop.permute.xlu0 %1258
      %vm1260 = vcmp.eq.s32.totalorder %v970, %v1214
      %vm1261 = vcmp.eq.s32.totalorder %v970, %v1217
      %vm1262 = vcmp.eq.s32.totalorder %v970, %v1220
      %vm1263 = vcmp.eq.s32.totalorder %v970, %v1223
      %vm1264 = vcmp.eq.s32.totalorder %v970, %v1226
      %vm1265 = vcmp.eq.s32.totalorder %v970, %v1229
      %vm1266 = vcmp.eq.s32.totalorder %v970, %v1232
      %vm1267 = vcmp.eq.s32.totalorder %v970, %v1235
      %vm1268 = vcmp.eq.s32.totalorder %v970, %v1238
      %vm1269 = vcmp.eq.s32.totalorder %v970, %v1241
      %vm1270 = vcmp.eq.s32.totalorder %v970, %v1244
      %vm1271 = vcmp.eq.s32.totalorder %v970, %v1247
      %vm1272 = vcmp.eq.s32.totalorder %v970, %v1250
      %vm1273 = vcmp.eq.s32.totalorder %v970, %v1253
      %vm1274 = vcmp.eq.s32.totalorder %v970, %v1256
      %vm1275 = vcmp.eq.s32.totalorder %v970, %v1259
      %v1276 = vsel %vm1260, %v1196, 0.0
      %v1277 = vsel %vm1261, %v1197, 0.0
      %v1278 = vsel %vm1262, %v1198, 0.0
      %v1279 = vsel %vm1263, %v1199, 0.0
      %v1280 = vsel %vm1264, %v1200, 0.0
      %v1281 = vsel %vm1265, %v1201, 0.0
      %v1282 = vsel %vm1266, %v1202, 0.0
      %v1283 = vsel %vm1267, %v1203, 0.0
      %v1284 = vsel %vm1268, %v1204, 0.0
      %v1285 = vsel %vm1269, %v1205, 0.0
      %v1286 = vsel %vm1270, %v1206, 0.0
      %v1287 = vsel %vm1271, %v1207, 0.0
      %v1288 = vsel %vm1272, %v1208, 0.0
      %v1289 = vsel %vm1273, %v1209, 0.0
      %v1290 = vsel %vm1274, %v1210, 0.0
      %v1291 = vsel %vm1275, %v1211, 0.0
      %1292 = vadd.xlane.f32.xlu0 %v1276
      %v1293 = vpop.xlane.xlu0 %1292
      %1294 = vadd.xlane.f32.xlu0 %v1277
      %v1295 = vpop.xlane.xlu0 %1294
      %1296 = vadd.xlane.f32.xlu0 %v1278
      %v1297 = vpop.xlane.xlu0 %1296
      %1298 = vadd.xlane.f32.xlu0 %v1279
      %v1299 = vpop.xlane.xlu0 %1298
      %1300 = vadd.xlane.f32.xlu0 %v1280
      %v1301 = vpop.xlane.xlu0 %1300
      %1302 = vadd.xlane.f32.xlu0 %v1281
      %v1303 = vpop.xlane.xlu0 %1302
      %1304 = vadd.xlane.f32.xlu0 %v1282
      %v1305 = vpop.xlane.xlu0 %1304
      %1306 = vadd.xlane.f32.xlu0 %v1283
      %v1307 = vpop.xlane.xlu0 %1306
      %1308 = vadd.xlane.f32.xlu0 %v1284
      %v1309 = vpop.xlane.xlu0 %1308
      %1310 = vadd.xlane.f32.xlu0 %v1285
      %v1311 = vpop.xlane.xlu0 %1310
      %1312 = vadd.xlane.f32.xlu0 %v1286
      %v1313 = vpop.xlane.xlu0 %1312
      %1314 = vadd.xlane.f32.xlu0 %v1287
      %v1315 = vpop.xlane.xlu0 %1314
      %1316 = vadd.xlane.f32.xlu0 %v1288
      %v1317 = vpop.xlane.xlu0 %1316
      %1318 = vadd.xlane.f32.xlu0 %v1289
      %v1319 = vpop.xlane.xlu0 %1318
      %1320 = vadd.xlane.f32.xlu0 %v1290
      %v1321 = vpop.xlane.xlu0 %1320
      %1322 = vadd.xlane.f32.xlu0 %v1291
      %v1323 = vpop.xlane.xlu0 %1322
      %v1324 = vmul.f32 %v1132, %v1196
      %v1325 = vmul.f32 %v1133, %v1197
      %v1326 = vmul.f32 %v1134, %v1198
      %v1327 = vmul.f32 %v1135, %v1199
      %v1328 = vmul.f32 %v1136, %v1200
      %v1329 = vmul.f32 %v1137, %v1201
      %v1330 = vmul.f32 %v1138, %v1202
      %v1331 = vmul.f32 %v1139, %v1203
      %v1332 = vmul.f32 %v1140, %v1204
      %v1333 = vmul.f32 %v1141, %v1205
      %v1334 = vmul.f32 %v1142, %v1206
      %v1335 = vmul.f32 %v1143, %v1207
      %v1336 = vmul.f32 %v1144, %v1208
      %v1337 = vmul.f32 %v1145, %v1209
      %v1338 = vmul.f32 %v1146, %v1210
      %v1339 = vmul.f32 %v1147, %v1211
      %1340 = vadd.xlane.f32.xlu0 %v1324
      %v1341 = vpop.xlane.xlu0 %1340
      %1342 = vadd.xlane.f32.xlu0 %v1325
      %v1343 = vpop.xlane.xlu0 %1342
      %1344 = vadd.xlane.f32.xlu0 %v1326
      %v1345 = vpop.xlane.xlu0 %1344
      %1346 = vadd.xlane.f32.xlu0 %v1327
      %v1347 = vpop.xlane.xlu0 %1346
      %1348 = vadd.xlane.f32.xlu0 %v1328
      %v1349 = vpop.xlane.xlu0 %1348
      %1350 = vadd.xlane.f32.xlu0 %v1329
      %v1351 = vpop.xlane.xlu0 %1350
      %1352 = vadd.xlane.f32.xlu0 %v1330
      %v1353 = vpop.xlane.xlu0 %1352
      %1354 = vadd.xlane.f32.xlu0 %v1331
      %v1355 = vpop.xlane.xlu0 %1354
      %1356 = vadd.xlane.f32.xlu0 %v1332
      %v1357 = vpop.xlane.xlu0 %1356
      %1358 = vadd.xlane.f32.xlu0 %v1333
      %v1359 = vpop.xlane.xlu0 %1358
      %1360 = vadd.xlane.f32.xlu0 %v1334
      %v1361 = vpop.xlane.xlu0 %1360
      %1362 = vadd.xlane.f32.xlu0 %v1335
      %v1363 = vpop.xlane.xlu0 %1362
      %1364 = vadd.xlane.f32.xlu0 %v1336
      %v1365 = vpop.xlane.xlu0 %1364
      %1366 = vadd.xlane.f32.xlu0 %v1337
      %v1367 = vpop.xlane.xlu0 %1366
      %1368 = vadd.xlane.f32.xlu0 %v1338
      %v1369 = vpop.xlane.xlu0 %1368
      %1370 = vadd.xlane.f32.xlu0 %v1339
      %v1371 = vpop.xlane.xlu0 %1370
      %v1372 = vsub.f32 0.0, %v1341
      %v1373 = vsub.f32 0.0, %v1343
      %v1374 = vsub.f32 0.0, %v1345
      %v1375 = vsub.f32 0.0, %v1347
      %v1376 = vsub.f32 0.0, %v1349
      %v1377 = vsub.f32 0.0, %v1351
      %v1378 = vsub.f32 0.0, %v1353
      %v1379 = vsub.f32 0.0, %v1355
      %v1380 = vsub.f32 0.0, %v1357
      %v1381 = vsub.f32 0.0, %v1359
      %v1382 = vsub.f32 0.0, %v1361
      %v1383 = vsub.f32 0.0, %v1363
      %v1384 = vsub.f32 0.0, %v1365
      %v1385 = vsub.f32 0.0, %v1367
      %v1386 = vsub.f32 0.0, %v1369
      %v1387 = vsub.f32 0.0, %v1371
      %v1388 = vsel %vm971, %v1132, %v891
      %v1389 = vsel %vm971, %v1133, %v896
      %v1390 = vsel %vm971, %v1134, %v901
      %v1391 = vsel %vm971, %v1135, %v906
      %v1392 = vsel %vm971, %v1136, %v911
      %v1393 = vsel %vm971, %v1137, %v916
      %v1394 = vsel %vm971, %v1138, %v921
      %v1395 = vsel %vm971, %v1139, %v926
      %v1396 = vsel %vm971, %v1140, %v931
      %v1397 = vsel %vm971, %v1141, %v936
      %v1398 = vsel %vm971, %v1142, %v941
      %v1399 = vsel %vm971, %v1143, %v946
      %v1400 = vsel %vm971, %v1144, %v951
      %v1401 = vsel %vm971, %v1145, %v956
      %v1402 = vsel %vm971, %v1146, %v961
      %v1403 = vsel %vm971, %v1147, %v966
      %vm1404 = vcmp.eq.s32.totalorder %v970, 2
      %v1405 = vsel %vm1404, %v1293, %v1388
      %v1406 = vsel %vm1404, %v1295, %v1389
      %v1407 = vsel %vm1404, %v1297, %v1390
      %v1408 = vsel %vm1404, %v1299, %v1391
      %v1409 = vsel %vm1404, %v1301, %v1392
      %v1410 = vsel %vm1404, %v1303, %v1393
      %v1411 = vsel %vm1404, %v1305, %v1394
      %v1412 = vsel %vm1404, %v1307, %v1395
      %v1413 = vsel %vm1404, %v1309, %v1396
      %v1414 = vsel %vm1404, %v1311, %v1397
      %v1415 = vsel %vm1404, %v1313, %v1398
      %v1416 = vsel %vm1404, %v1315, %v1399
      %v1417 = vsel %vm1404, %v1317, %v1400
      %v1418 = vsel %vm1404, %v1319, %v1401
      %v1419 = vsel %vm1404, %v1321, %v1402
      %v1420 = vsel %vm1404, %v1323, %v1403
      %vm1421 = vcmp.eq.s32.totalorder %v970, 3
      %v1422 = vsel %vm1421, %v1372, %v1405
      %v1423 = vsel %vm1421, %v1373, %v1406
      %v1424 = vsel %vm1421, %v1374, %v1407
      %v1425 = vsel %vm1421, %v1375, %v1408
      %v1426 = vsel %vm1421, %v1376, %v1409
      %v1427 = vsel %vm1421, %v1377, %v1410
      %v1428 = vsel %vm1421, %v1378, %v1411
      %v1429 = vsel %vm1421, %v1379, %v1412
      %v1430 = vsel %vm1421, %v1380, %v1413
      %v1431 = vsel %vm1421, %v1381, %v1414
      %v1432 = vsel %vm1421, %v1382, %v1415
      %v1433 = vsel %vm1421, %v1383, %v1416
      %v1434 = vsel %vm1421, %v1384, %v1417
      %v1435 = vsel %vm1421, %v1385, %v1418
      %v1436 = vsel %vm1421, %v1386, %v1419
      %v1437 = vsel %vm1421, %v1387, %v1420
      %1438 = vst [vmem:[%s280] sm:$0xff] %v1422
      %1439 = vst [vmem:[%s280 + $0x8] sm:$0xff] %v1423
      %1440 = vst [vmem:[%s280 + $0x10] sm:$0xff] %v1424
      %1441 = vst [vmem:[%s280 + $0x18] sm:$0xff] %v1425
      %1442 = vst [vmem:[%s280 + $0x20] sm:$0xff] %v1426
      %1443 = vst [vmem:[%s280 + $0x28] sm:$0xff] %v1427
      %1444 = vst [vmem:[%s280 + $0x30] sm:$0xff] %v1428
      %1445 = vst [vmem:[%s280 + $0x38] sm:$0xff] %v1429
      %1446 = vst [vmem:[%s280 + $0x40] sm:$0xff] %v1430
      %1447 = vst [vmem:[%s280 + $0x48] sm:$0xff] %v1431
      %1448 = vst [vmem:[%s280 + $0x50] sm:$0xff] %v1432
      %1449 = vst [vmem:[%s280 + $0x58] sm:$0xff] %v1433
      %1450 = vst [vmem:[%s280 + $0x60] sm:$0xff] %v1434
      %1451 = vst [vmem:[%s280 + $0x68] sm:$0xff] %v1435
      %1452 = vst [vmem:[%s280 + $0x70] sm:$0xff] %v1436
      %1453 = vst [vmem:[%s280 + $0x78] sm:$0xff] %v1437
      %s1454 = smul.u32 16, %s18
      %p1455 = scmp.lt.s32.totalorder %s1454, 31
      %s1456 = scalar_select %p1455, %s1454, 31
      %s1457 = smul.addr %s1456, 8
      %s1458 = scalar_lea.vmem %s7, %s1457
      // Predicated region
      $region49: #{actor_critic_evaluate.1} parent=47 // pred_check
        %p1459 = pneg %p188
      $region50: #{actor_critic_evaluate.1} parent=47 // pred_check_branch
        %1461 = sbr.rel (%p1459) target = $region52
      $region51: #{actor_critic_evaluate.1} parent=47 // pred_region
        %s1462 = smul.u32 16, %s18
      $region52: #{actor_critic_evaluate.1} parent=47 // pred_fallthru
        _
    $region48: #{actor_critic_evaluate.1} parent=5 // pred_fallthru
      _
    %p1463 = scmp.le.s32.totalorder 2, %s13
    // Predicated region
    $region53: #{actor_critic_evaluate.1} parent=5 // pred_check
      %p1464 = pneg %p1463
    $region54: #{actor_critic_evaluate.1} parent=5 // pred_check_branch
      %1466 = sbr.rel (%p1464) target = $region56
    $region55: #{actor_critic_evaluate.1} parent=5 // pred_region
      %s1467 = ssub.s32 %s13, 2
      // Predicated region
      $region57: #{actor_critic_evaluate.1} parent=55 // pred_check
        %p1468 = pneg %p194
      $region58: #{actor_critic_evaluate.1} parent=55 // pred_check_branch
        %1470 = sbr.rel (%p1468) target = $region60
      $region59: #{actor_critic_evaluate.1} parent=55 // pred_region
        %s1471 = smul.u32 16, %s19
        %p1472 = scmp.lt.s32.totalorder %s1471, 31
        %s1473 = scalar_select %p1472, %s1471, 31
        %s1474 = smul.addr %s1473, 8
        %s1475 = scalar_lea.vmem %s7, %s1474
      $region60: #{actor_critic_evaluate.1} parent=55 // pred_fallthru
        _
    $region56: #{actor_critic_evaluate.1} parent=5 // pred_fallthru
      _
  $region6: #{actor_critic_evaluate.1} parent=0 // loop_footer
    %s17 = sadd.s32 1, %s13
  $region7: #{actor_critic_evaluate.1} parent=0 // loop_footer_branch
    %12 = sbr.rel target = $region3
  $region8: #{actor_critic_evaluate.1} parent=0 // loop_exit
    _

</llo_original>
